<compile_context>
chip_gen: v7x
topology: tpu7x:2x2x1
jax: 0.10.0
libtpu: 0.0.40
codegen_flags: <defaults>
</compile_context>

<pallas_src>
import jax
import jax.numpy as jnp
from jax.experimental import pallas as pl
from jax.experimental.pallas import tpu as pltpu

_LANE = 128
_RESIDENT_A_BYTES = 8 * 1024 * 1024  # keep whole bf16 A resident in VMEM below this


def _round_up(v, m):
    return (v + m - 1) // m * m


# ----------------------------- fused Pallas kernel -------------------------


def _fused_graphsage_kernel(x_ref, a_ref, wl_ref, wr_ref, b_ref, o_ref, h0_ref, h1_ref):
    """One grid step = one (stage, row-tile).

    stage s reads the full h from the ping/pong buffer of parity s%2 and writes
    its row tile into the buffer of parity (s+1)%2 (or into o_ref for the last
    stage).  Stage formula (uniform for SAGEConv and the final Linear):

        out = (A_rows @ h_full) @ W_l + h_rows @ W_r + b        (+ ReLU if not last)
    """
    s = pl.program_id(0)
    r = pl.program_id(1)
    last = pl.num_programs(0) - 1
    tm = a_ref.shape[0]

    # Seed the ping buffer with the (padded, bf16) input features once.
    @pl.when((s == 0) & (r == 0))
    def _():
        h0_ref[...] = x_ref[...]

    def stage(src_ref, dst_ref):
        row = pl.multiple_of(r * tm, 128)
        h_full = src_ref[...]                       # (n_pad, d_pad) bf16
        h_rows = src_ref[pl.ds(row, tm), :]         # (tm, d_pad)   bf16

        # mean aggregation over in-neighbours: A[rows, :] @ h  (MXU, f32 acc)
        agg = jnp.dot(a_ref[...], h_full, preferred_element_type=jnp.float32)

        out = (
            jnp.dot(agg.astype(jnp.bfloat16), wl_ref[0],
                    preferred_element_type=jnp.float32)
            + jnp.dot(h_rows, wr_ref[0], preferred_element_type=jnp.float32)
            + b_ref[0]
        )

        @pl.when(s != last)
        def _():
            dst_ref[pl.ds(row, tm), :] = jnp.maximum(out, 0.0).astype(jnp.bfloat16)

        @pl.when(s == last)
        def _():
            o_ref[...] = out  # final Linear: no activation

    @pl.when(s % 2 == 0)
    def _():
        stage(h0_ref, h1_ref)

    @pl.when(s % 2 == 1)
    def _():
        stage(h1_ref, h0_ref)


# ----------------------------- host-side helpers ----------------------------


def build_norm_adjacency(edge_index, num_nodes):
    """Dense row-normalized adjacency: A[i, j] = count(j->i) / max(indeg(i), 1)."""
    src = edge_index[0]
    dst = edge_index[1]
    adj = jnp.zeros((num_nodes, num_nodes), jnp.float32)
    adj = adj.at[dst, src].add(1.0)
    indeg = jnp.clip(adj.sum(axis=1, keepdims=True), 1.0, None)
    return adj / indeg


def _pad2(w, rows, cols):
    out = jnp.zeros((rows, cols), jnp.float32)
    return out.at[: w.shape[0], : w.shape[1]].set(w.astype(jnp.float32))


def _pack_params(params, d_pad):
    """Stack per-stage (W_l, W_r, b) padded to (d_pad, d_pad); Linear => W_l = 0."""
    sage_stages = [
        ("b1l1_wl", "b1l1_wr", "b1l1_b"),
        ("b1l2_wl", "b1l2_wr", "b1l2_b"),
        ("b2l1_wl", "b2l1_wr", "b2l1_b"),
        ("b2l2_wl", "b2l2_wr", "b2l2_b"),
    ]
    wl_list, wr_list, b_list = [], [], []
    for wl_k, wr_k, b_k in sage_stages:
        wl_list.append(_pad2(params[wl_k], d_pad, d_pad))
        wr_list.append(_pad2(params[wr_k], d_pad, d_pad))
        b_list.append(_pad2(params[b_k], 1, d_pad))
    # final fc: y = x @ W + b  (no aggregation term -> W_l = 0)
    wl_list.append(jnp.zeros((d_pad, d_pad), jnp.float32))
    wr_list.append(_pad2(params["fc_w"], d_pad, d_pad))
    b_list.append(_pad2(params["fc_b"], 1, d_pad))

    wl = jnp.stack(wl_list).astype(jnp.bfloat16)   # (5, d_pad, d_pad)
    wr = jnp.stack(wr_list).astype(jnp.bfloat16)   # (5, d_pad, d_pad)
    b = jnp.stack(b_list)                          # (5, 1, d_pad) f32
    return wl, wr, b


def init_params(key, input_dim, hidden_dim, output_dim):
    """Deterministic Kaiming-uniform-style init (like torch Linear default)."""

    def lin(k, d_in, d_out, with_bias=True):
        kw, kb = jax.random.split(k)
        bound = 1.0 / jnp.sqrt(jnp.float32(d_in))
        w = jax.random.uniform(kw, (d_in, d_out), jnp.float32, -bound, bound)
        if with_bias:
            b = jax.random.uniform(kb, (1, d_out), jnp.float32, -bound, bound)
        else:
            b = jnp.zeros((1, d_out), jnp.float32)
        return w, b

    keys = jax.random.split(key, 9)
    params = {}
    # block 1: SAGEConv(input, hidden), SAGEConv(hidden, hidden)
    params["b1l1_wl"], params["b1l1_b"] = lin(keys[0], input_dim, hidden_dim)
    params["b1l1_wr"], _ = lin(keys[1], input_dim, hidden_dim, with_bias=False)
    params["b1l2_wl"], params["b1l2_b"] = lin(keys[2], hidden_dim, hidden_dim)
    params["b1l2_wr"], _ = lin(keys[3], hidden_dim, hidden_dim, with_bias=False)
    # block 2: SAGEConv(hidden, output), SAGEConv(output, output)
    params["b2l1_wl"], params["b2l1_b"] = lin(keys[4], hidden_dim, output_dim)
    params["b2l1_wr"], _ = lin(keys[5], hidden_dim, output_dim, with_bias=False)
    params["b2l2_wl"], params["b2l2_b"] = lin(keys[6], output_dim, output_dim)
    params["b2l2_wr"], _ = lin(keys[7], output_dim, output_dim, with_bias=False)
    # final fc: Linear(output, output)
    params["fc_w"], params["fc_b"] = lin(keys[8], output_dim, output_dim)
    return params


# ----------------------------- forward pass ---------------------------------


def graphsage_model_forward(params, x, edge_index):
    n, d_in = x.shape
    hidden_dim = params["b1l1_wl"].shape[1]
    output_dim = params["fc_w"].shape[1]
    d_pad = _round_up(max(d_in, hidden_dim, output_dim), _LANE)

    # dense row-normalized adjacency (mean aggregation == A @ X)
    a = build_norm_adjacency(edge_index, n)

    # choose node padding / row-tile size
    n_pad0 = _round_up(n, _LANE)
    if n_pad0 * n_pad0 * 2 <= _RESIDENT_A_BYTES:
        n_pad, tm = n_pad0, n_pad0          # whole A resident in VMEM, loaded once
    else:
        tm = 256                            # streamed (TM, N) bf16 row panels
        n_pad = _round_up(n, tm)

    a_pad = (
        jnp.zeros((n_pad, n_pad), jnp.float32).at[:n, :n].set(a).astype(jnp.bfloat16)
    )
    x_pad = (
        jnp.zeros((n_pad, d_pad), jnp.float32).at[:n, :d_in].set(x).astype(jnp.bfloat16)
    )
    wl, wr, b = _pack_params(params, d_pad)
    num_stages = wl.shape[0]                # 5
    num_row_tiles = n_pad // tm

    # rough VMEM need (double-buffered inputs/outputs + scratch); raise the
    # scoped limit only when we actually need it (v7x default scoped = 32 MiB).
    vmem_bytes = (
        2 * tm * n_pad * 2          # A panels (bf16, double-buffered)
        + 2 * n_pad * d_pad * 2     # resident x
        + 2 * n_pad * d_pad * 2     # h ping/pong scratch
        + 2 * tm * d_pad * 4        # output blocks (f32, double-buffered)
        + 4 * 2 * d_pad * d_pad * 2  # weight / bias blocks
    )
    cp_kwargs = dict(dimension_semantics=("arbitrary", "arbitrary"))
    if vmem_bytes > 24 * 1024 * 1024:
        cp_kwargs["vmem_limit_bytes"] = min(
            int(vmem_bytes * 3 // 2), 64 * 1024 * 1024
        )
    compiler_params = pltpu.CompilerParams(**cp_kwargs)

    out_pad = pl.pallas_call(
        _fused_graphsage_kernel,
        out_shape=jax.ShapeDtypeStruct((n_pad, d_pad), jnp.float32),
        grid=(num_stages, num_row_tiles),
        in_specs=[
            pl.BlockSpec((n_pad, d_pad), lambda s, r: (0, 0)),        # x (resident)
            pl.BlockSpec((tm, n_pad), lambda s, r: (r, 0)),           # A row panel
            pl.BlockSpec((1, d_pad, d_pad), lambda s, r: (s, 0, 0)),  # W_l[s]
            pl.BlockSpec((1, d_pad, d_pad), lambda s, r: (s, 0, 0)),  # W_r[s]
            pl.BlockSpec((1, 1, d_pad), lambda s, r: (s, 0, 0)),      # b[s]
        ],
        out_specs=pl.BlockSpec((tm, d_pad), lambda s, r: (r, 0)),
        scratch_shapes=[
            pltpu.VMEM((n_pad, d_pad), jnp.bfloat16),  # h ping
            pltpu.VMEM((n_pad, d_pad), jnp.bfloat16),  # h pong
        ],
        compiler_params=compiler_params,
    )(x_pad, a_pad, wl, wr, b)

    return out_pad[:n, :output_dim]


if __name__ == "__main__":
    key = jax.random.PRNGKey(0)
    k_x, k_e, k_p = jax.random.split(key, 3)

    num_nodes = 64
    num_edges = 256
    input_dim = 32
    hidden_dim = 32
    output_dim = 16

    x = jax.random.normal(k_x, (num_nodes, input_dim), jnp.float32)
    edge_index = jax.random.randint(k_e, (2, num_edges), 0, num_nodes, jnp.int32)
    params = init_params(k_p, input_dim, hidden_dim, output_dim)

    out = jax.jit(graphsage_model_forward)(params, x, edge_index)
    jax.block_until_ready(out)

    assert out.shape == (num_nodes, output_dim)
    assert bool(jnp.all(jnp.isfinite(out)))
    print("KERNEL_OK")
</pallas_src>

<mosaic_0001>
module attributes {stable_mosaic.version = 11 : i64} {
  func.func private @main(%arg0: i32) attributes {dimension_semantics = [#tpu.dimension_semantics<core_parallel>], iteration_bounds = array<i64: 2>, tpu.core_type = #tpu.core_type<sc_scalar_subcore>, window_params = []} {
    return
  }
}

module attributes {stable_mosaic.version = 11 : i64} {
  func.func private @main(%arg0: i32) attributes {dimension_semantics = [#tpu.dimension_semantics<core_parallel>], iteration_bounds = array<i64: 2>, tpu.core_type = #tpu.core_type<sc_scalar_subcore>, window_params = []} {
    return
  }
}

module attributes {stable_mosaic.version = 11 : i64} {
  func.func @_fused_graphsage_kernel(%arg0: i32, %arg1: i32, %arg2: memref<128x128xbf16, #tpu.memory_space<vmem>>, %arg3: memref<128x128xbf16, #tpu.memory_space<vmem>>, %arg4: memref<1x128x128xbf16, #tpu.memory_space<vmem>>, %arg5: memref<1x128x128xbf16, #tpu.memory_space<vmem>>, %arg6: memref<1x1x128xf32, #tpu.memory_space<vmem>>, %arg7: memref<128x128xf32, #tpu.memory_space<vmem>>, %arg8: memref<128x128xbf16, #tpu.memory_space<vmem>>, %arg9: memref<128x128xbf16, #tpu.memory_space<vmem>>) attributes {dimension_semantics = [#tpu.dimension_semantics<arbitrary>, #tpu.dimension_semantics<arbitrary>], iteration_bounds = array<i64: 5, 1>, scalar_prefetch = 0 : i64, scratch_operands = 2 : i64, tpu.core_type = #tpu.core_type<tc>, window_params = [{pipeline_mode = #tpu.pipeline_mode<synchronous>, transform_indices = @transform_0, window_bounds = array<i64: 128, 128>}, {transform_indices = @transform_1, window_bounds = array<i64: 128, 128>}, {transform_indices = @transform_2, window_bounds = array<i64: 1, 128, 128>}, {transform_indices = @transform_3, window_bounds = array<i64: 1, 128, 128>}, {transform_indices = @transform_4, window_bounds = array<i64: 1, 1, 128>}, {transform_indices = @transform_5, window_bounds = array<i64: 128, 128>}]} {
    %c0_i32 = arith.constant 0 : i32
    %0 = arith.cmpi eq, %arg0, %c0_i32 : i32
    %c0_i32_0 = arith.constant 0 : i32
    %1 = arith.cmpi eq, %arg1, %c0_i32_0 : i32
    %2 = arith.andi %0, %1 : i1
    %3 = arith.extui %2 : i1 to i32
    %c0_i32_1 = arith.constant 0 : i32
    %4 = arith.cmpi ne, %3, %c0_i32_1 : i32
    scf.if %4 {
      %c0 = arith.constant 0 : index
      %c0_16 = arith.constant 0 : index
      %31 = vector.load %arg2[%c0, %c0_16] : memref<128x128xbf16, #tpu.memory_space<vmem>>, vector<128x128xbf16>
      %c0_17 = arith.constant 0 : index
      %c0_18 = arith.constant 0 : index
      %32 = vector.load %arg8[%c0_17, %c0_18] : memref<128x128xbf16, #tpu.memory_space<vmem>>, vector<128x128xbf16>
      tpu.vector_store %arg8[%c0_17, %c0_18], %31 {strides = array<i32>} : memref<128x128xbf16, #tpu.memory_space<vmem>>, vector<128x128xbf16>,
    } else {
    }
    %c2_i32 = arith.constant 2 : i32
    %c0_i32_2 = arith.constant 0 : i32
    %5 = arith.cmpi eq, %c2_i32, %c0_i32_2 : i32
    %c1_i32 = arith.constant 1 : i32
    %6 = arith.select %5, %c1_i32, %c2_i32 : i32
    %7 = arith.remsi %arg0, %6 : i32
    %c0_i32_3 = arith.constant 0 : i32
    %8 = arith.cmpi ne, %7, %c0_i32_3 : i32
    %c0_i32_4 = arith.constant 0 : i32
    %9 = arith.cmpi slt, %7, %c0_i32_4 : i32
    %c0_i32_5 = arith.constant 0 : i32
    %10 = arith.cmpi slt, %6, %c0_i32_5 : i32
    %11 = arith.xori %9, %10 : i1
    %12 = arith.andi %11, %8 : i1
    %13 = arith.addi %7, %6 : i32
    %14 = arith.select %12, %13, %7 : i32
    %c0_i32_6 = arith.constant 0 : i32
    %15 = arith.cmpi eq, %14, %c0_i32_6 : i32
    %16 = arith.extui %15 : i1 to i32
    %c0_i32_7 = arith.constant 0 : i32
    %17 = arith.cmpi ne, %16, %c0_i32_7 : i32
    scf.if %17 {
      %c128_i32 = arith.constant 128 : i32
      %31 = arith.muli %arg1, %c128_i32 : i32
      %32 = tpu.assume_multiple %31, 128 : i32
      %c0 = arith.constant 0 : index
      %c0_16 = arith.constant 0 : index
      %33 = vector.load %arg8[%c0, %c0_16] : memref<128x128xbf16, #tpu.memory_space<vmem>>, vector<128x128xbf16>
      %34 = arith.index_cast %32 : i32 to index
      %c0_17 = arith.constant 0 : index
      %35 = vector.load %arg8[%34, %c0_17] : memref<128x128xbf16, #tpu.memory_space<vmem>>, vector<128x128xbf16>
      %c0_18 = arith.constant 0 : index
      %c0_19 = arith.constant 0 : index
      %36 = vector.load %arg3[%c0_18, %c0_19] : memref<128x128xbf16, #tpu.memory_space<vmem>>, vector<128x128xbf16>
      %cst = arith.constant dense<0.000000e+00> : vector<128x128xf32>
      %37 = tpu.matmul %36, %33, %cst {dimension_numbers = #tpu.dot_dimension_numbers<[1], [0], [0], [1], [0, 0, 1, 1], [], []>} : vector<128x128xbf16>, vector<128x128xbf16>, vector<128x128xf32> -> vector<128x128xf32>
      %38 = arith.truncf %37 : vector<128x128xf32> to vector<128x128xbf16>
      %c0_20 = arith.constant 0 : index
      %c0_21 = arith.constant 0 : index
      %c0_22 = arith.constant 0 : index
      %39 = vector.load %arg4[%c0_20, %c0_21, %c0_22] : memref<1x128x128xbf16, #tpu.memory_space<vmem>>, vector<1x128x128xbf16>
      %40 = vector.shape_cast %39 : vector<1x128x128xbf16> to vector<128x128xbf16>
      %cst_23 = arith.constant dense<0.000000e+00> : vector<128x128xf32>
      %41 = tpu.matmul %38, %40, %cst_23 {dimension_numbers = #tpu.dot_dimension_numbers<[1], [0], [0], [1], [0, 0, 1, 1], [], []>} : vector<128x128xbf16>, vector<128x128xbf16>, vector<128x128xf32> -> vector<128x128xf32>
      %c0_24 = arith.constant 0 : index
      %c0_25 = arith.constant 0 : index
      %c0_26 = arith.constant 0 : index
      %42 = vector.load %arg5[%c0_24, %c0_25, %c0_26] : memref<1x128x128xbf16, #tpu.memory_space<vmem>>, vector<1x128x128xbf16>
      %43 = vector.shape_cast %42 : vector<1x128x128xbf16> to vector<128x128xbf16>
      %cst_27 = arith.constant dense<0.000000e+00> : vector<128x128xf32>
      %44 = tpu.matmul %35, %43, %cst_27 {dimension_numbers = #tpu.dot_dimension_numbers<[1], [0], [0], [1], [0, 0, 1, 1], [], []>} : vector<128x128xbf16>, vector<128x128xbf16>, vector<128x128xf32> -> vector<128x128xf32>
      %45 = arith.addf %41, %44 : vector<128x128xf32>
      %c0_28 = arith.constant 0 : index
      %c0_29 = arith.constant 0 : index
      %c0_30 = arith.constant 0 : index
      %46 = vector.load %arg6[%c0_28, %c0_29, %c0_30] : memref<1x1x128xf32, #tpu.memory_space<vmem>>, vector<1x1x128xf32>
      %47 = vector.shape_cast %46 : vector<1x1x128xf32> to vector<1x128xf32>
      %48 = vector.broadcast %47 : vector<1x128xf32> to vector<128x128xf32>
      %49 = arith.addf %45, %48 : vector<128x128xf32>
      %c4_i32 = arith.constant 4 : i32
      %50 = arith.cmpi ne, %arg0, %c4_i32 : i32
      %51 = arith.extui %50 : i1 to i32
      %c0_i32_31 = arith.constant 0 : i32
      %52 = arith.cmpi ne, %51, %c0_i32_31 : i32
      scf.if %52 {
        %cst_34 = arith.constant 0.000000e+00 : f32
        %56 = vector.broadcast %cst_34 : f32 to vector<128x128xf32>
        %57 = arith.maximumf %49, %56 : vector<128x128xf32>
        %58 = arith.truncf %57 : vector<128x128xf32> to vector<128x128xbf16>
        %59 = arith.index_cast %32 : i32 to index
        %c0_35 = arith.constant 0 : index
        %60 = vector.load %arg9[%59, %c0_35] : memref<128x128xbf16, #tpu.memory_space<vmem>>, vector<128x128xbf16>
        tpu.vector_store %arg9[%59, %c0_35], %58 {strides = array<i32>} : memref<128x128xbf16, #tpu.memory_space<vmem>>, vector<128x128xbf16>,
      } else {
      }
      %c4_i32_32 = arith.constant 4 : i32
      %53 = arith.cmpi eq, %arg0, %c4_i32_32 : i32
      %54 = arith.extui %53 : i1 to i32
      %c0_i32_33 = arith.constant 0 : i32
      %55 = arith.cmpi ne, %54, %c0_i32_33 : i32
      scf.if %55 {
        %c0_34 = arith.constant 0 : index
        %c0_35 = arith.constant 0 : index
        %56 = vector.load %arg7[%c0_34, %c0_35] : memref<128x128xf32, #tpu.memory_space<vmem>>, vector<128x128xf32>
        tpu.vector_store %arg7[%c0_34, %c0_35], %49 {strides = array<i32>} : memref<128x128xf32, #tpu.memory_space<vmem>>, vector<128x128xf32>,
      } else {
      }
    } else {
    }
    %c2_i32_8 = arith.constant 2 : i32
    %c0_i32_9 = arith.constant 0 : i32
    %18 = arith.cmpi eq, %c2_i32_8, %c0_i32_9 : i32
    %c1_i32_10 = arith.constant 1 : i32
    %19 = arith.select %18, %c1_i32_10, %c2_i32_8 : i32
    %20 = arith.remsi %arg0, %19 : i32
    %c0_i32_11 = arith.constant 0 : i32
    %21 = arith.cmpi ne, %20, %c0_i32_11 : i32
    %c0_i32_12 = arith.constant 0 : i32
    %22 = arith.cmpi slt, %20, %c0_i32_12 : i32
    %c0_i32_13 = arith.constant 0 : i32
    %23 = arith.cmpi slt, %19, %c0_i32_13 : i32
    %24 = arith.xori %22, %23 : i1
    %25 = arith.andi %24, %21 : i1
    %26 = arith.addi %20, %19 : i32
    %27 = arith.select %25, %26, %20 : i32
    %c1_i32_14 = arith.constant 1 : i32
    %28 = arith.cmpi eq, %27, %c1_i32_14 : i32
    %29 = arith.extui %28 : i1 to i32
    %c0_i32_15 = arith.constant 0 : i32
    %30 = arith.cmpi ne, %29, %c0_i32_15 : i32
    scf.if %30 {
      %c128_i32 = arith.constant 128 : i32
      %31 = arith.muli %arg1, %c128_i32 : i32
      %32 = tpu.assume_multiple %31, 128 : i32
      %c0 = arith.constant 0 : index
      %c0_16 = arith.constant 0 : index
      %33 = vector.load %arg9[%c0, %c0_16] : memref<128x128xbf16, #tpu.memory_space<vmem>>, vector<128x128xbf16>
      %34 = arith.index_cast %32 : i32 to index
      %c0_17 = arith.constant 0 : index
      %35 = vector.load %arg9[%34, %c0_17] : memref<128x128xbf16, #tpu.memory_space<vmem>>, vector<128x128xbf16>
      %c0_18 = arith.constant 0 : index
      %c0_19 = arith.constant 0 : index
      %36 = vector.load %arg3[%c0_18, %c0_19] : memref<128x128xbf16, #tpu.memory_space<vmem>>, vector<128x128xbf16>
      %cst = arith.constant dense<0.000000e+00> : vector<128x128xf32>
      %37 = tpu.matmul %36, %33, %cst {dimension_numbers = #tpu.dot_dimension_numbers<[1], [0], [0], [1], [0, 0, 1, 1], [], []>} : vector<128x128xbf16>, vector<128x128xbf16>, vector<128x128xf32> -> vector<128x128xf32>
      %38 = arith.truncf %37 : vector<128x128xf32> to vector<128x128xbf16>
      %c0_20 = arith.constant 0 : index
      %c0_21 = arith.constant 0 : index
      %c0_22 = arith.constant 0 : index
      %39 = vector.load %arg4[%c0_20, %c0_21, %c0_22] : memref<1x128x128xbf16, #tpu.memory_space<vmem>>, vector<1x128x128xbf16>
      %40 = vector.shape_cast %39 : vector<1x128x128xbf16> to vector<128x128xbf16>
      %cst_23 = arith.constant dense<0.000000e+00> : vector<128x128xf32>
      %41 = tpu.matmul %38, %40, %cst_23 {dimension_numbers = #tpu.dot_dimension_numbers<[1], [0], [0], [1], [0, 0, 1, 1], [], []>} : vector<128x128xbf16>, vector<128x128xbf16>, vector<128x128xf32> -> vector<128x128xf32>
      %c0_24 = arith.constant 0 : index
      %c0_25 = arith.constant 0 : index
      %c0_26 = arith.constant 0 : index
      %42 = vector.load %arg5[%c0_24, %c0_25, %c0_26] : memref<1x128x128xbf16, #tpu.memory_space<vmem>>, vector<1x128x128xbf16>
      %43 = vector.shape_cast %42 : vector<1x128x128xbf16> to vector<128x128xbf16>
      %cst_27 = arith.constant dense<0.000000e+00> : vector<128x128xf32>
      %44 = tpu.matmul %35, %43, %cst_27 {dimension_numbers = #tpu.dot_dimension_numbers<[1], [0], [0], [1], [0, 0, 1, 1], [], []>} : vector<128x128xbf16>, vector<128x128xbf16>, vector<128x128xf32> -> vector<128x128xf32>
      %45 = arith.addf %41, %44 : vector<128x128xf32>
      %c0_28 = arith.constant 0 : index
      %c0_29 = arith.constant 0 : index
      %c0_30 = arith.constant 0 : index
      %46 = vector.load %arg6[%c0_28, %c0_29, %c0_30] : memref<1x1x128xf32, #tpu.memory_space<vmem>>, vector<1x1x128xf32>
      %47 = vector.shape_cast %46 : vector<1x1x128xf32> to vector<1x128xf32>
      %48 = vector.broadcast %47 : vector<1x128xf32> to vector<128x128xf32>
      %49 = arith.addf %45, %48 : vector<128x128xf32>
      %c4_i32 = arith.constant 4 : i32
      %50 = arith.cmpi ne, %arg0, %c4_i32 : i32
      %51 = arith.extui %50 : i1 to i32
      %c0_i32_31 = arith.constant 0 : i32
      %52 = arith.cmpi ne, %51, %c0_i32_31 : i32
      scf.if %52 {
        %cst_34 = arith.constant 0.000000e+00 : f32
        %56 = vector.broadcast %cst_34 : f32 to vector<128x128xf32>
        %57 = arith.maximumf %49, %56 : vector<128x128xf32>
        %58 = arith.truncf %57 : vector<128x128xf32> to vector<128x128xbf16>
        %59 = arith.index_cast %32 : i32 to index
        %c0_35 = arith.constant 0 : index
        %60 = vector.load %arg8[%59, %c0_35] : memref<128x128xbf16, #tpu.memory_space<vmem>>, vector<128x128xbf16>
        tpu.vector_store %arg8[%59, %c0_35], %58 {strides = array<i32>} : memref<128x128xbf16, #tpu.memory_space<vmem>>, vector<128x128xbf16>,
      } else {
      }
      %c4_i32_32 = arith.constant 4 : i32
      %53 = arith.cmpi eq, %arg0, %c4_i32_32 : i32
      %54 = arith.extui %53 : i1 to i32
      %c0_i32_33 = arith.constant 0 : i32
      %55 = arith.cmpi ne, %54, %c0_i32_33 : i32
      scf.if %55 {
        %c0_34 = arith.constant 0 : index
        %c0_35 = arith.constant 0 : index
        %56 = vector.load %arg7[%c0_34, %c0_35] : memref<128x128xf32, #tpu.memory_space<vmem>>, vector<128x128xf32>
        tpu.vector_store %arg7[%c0_34, %c0_35], %49 {strides = array<i32>} : memref<128x128xf32, #tpu.memory_space<vmem>>, vector<128x128xf32>,
      } else {
      }
    } else {
    }
    return
  }
  func.func @transform_0(%arg0: i32, %arg1: i32) -> (i32, i32) {
    %c0_i32 = arith.constant 0 : i32
    %c0_i32_0 = arith.constant 0 : i32
    %c0_i32_1 = arith.constant 0 : i32
    return %c0_i32, %c0_i32_0 : i32, i32
  }
  func.func @transform_1(%arg0: i32, %arg1: i32) -> (i32, i32) {
    %c0_i32 = arith.constant 0 : i32
    %c0_i32_0 = arith.constant 0 : i32
    return %arg1, %c0_i32 : i32, i32
  }
  func.func @transform_2(%arg0: i32, %arg1: i32) -> (i32, i32, i32) {
    %c0_i32 = arith.constant 0 : i32
    %c0_i32_0 = arith.constant 0 : i32
    %c0_i32_1 = arith.constant 0 : i32
    return %arg0, %c0_i32, %c0_i32_0 : i32, i32, i32
  }
  func.func @transform_3(%arg0: i32, %arg1: i32) -> (i32, i32, i32) {
    %c0_i32 = arith.constant 0 : i32
    %c0_i32_0 = arith.constant 0 : i32
    %c0_i32_1 = arith.constant 0 : i32
    return %arg0, %c0_i32, %c0_i32_0 : i32, i32, i32
  }
  func.func @transform_4(%arg0: i32, %arg1: i32) -> (i32, i32, i32) {
    %c0_i32 = arith.constant 0 : i32
    %c0_i32_0 = arith.constant 0 : i32
    %c0_i32_1 = arith.constant 0 : i32
    return %arg0, %c0_i32, %c0_i32_0 : i32, i32, i32
  }
  func.func @transform_5(%arg0: i32, %arg1: i32) -> (i32, i32) {
    %c0_i32 = arith.constant 0 : i32
    %c0_i32_0 = arith.constant 0 : i32
    return %arg1, %c0_i32 : i32, i32
  }
}

</mosaic_0001>

<llo_original>
// kernel: graphsage_model_forward.1
$region0: #{graphsage_model_forward.1}
  #allocation0 [shape = 'u32[]', space=smem, size = 0x4, offset = 0x4, fixed_abs, tag = 'smem constant byte address 0x4 - core index']
  #allocation1 [shape = 'u32[144,128]{1,0:T(1,128)}', space=vmem, size = 0x12000, scoped, tag = 'internal scratch']
  #allocation2 [shape = 'bf16[128,128]{1,0:T(16,128)(2,1)}', space=vmem, size = 0x8000, scoped, tag = 'scratch operand']
  #allocation3 [shape = 'bf16[128,128]{1,0:T(16,128)(2,1)}', space=vmem, size = 0x8000, scoped, tag = 'scratch operand']
  %s0 = inlined_call_operand.vmem [shape: bf16[128,128], index: 0, kind: input, shape index: {}]
  %s1 = inlined_call_operand.vmem [shape: bf16[128,128], index: 1, kind: input, shape index: {}]
  %s2 = inlined_call_operand.vmem [shape: bf16[5,128,128], index: 2, kind: input, shape index: {}]
  %s3 = inlined_call_operand.vmem [shape: bf16[5,128,128], index: 3, kind: input, shape index: {}]
  %s4 = inlined_call_operand.vmem [shape: f32[5,1,128], index: 4, kind: input, shape index: {}]
  %s5 = inlined_call_operand.vmem [shape: f32[128,128], index: 5, kind: output, shape index: {}]
  %s6 = sld [smem:[#allocation0]]
  $region81: #{graphsage_model_forward.1} parent=0
    _
  %s8 = ssub.s32 1, %s6
  %s9 = scalar_select 0, %s8, %s6
  loop: start=0, step=1, limit=7
  $region2: #{graphsage_model_forward.1} parent=0 // loop_pre_header
    _
  $region3: #{graphsage_model_forward.1} parent=0 // loop_header
    %s11 = sphi 0, %s15
    %p12 = scmp.ge.s32.totalorder %s11, 7
    %s18 = sphi 0, %s30
    %s19 = sphi 0, %s26
    %s20 = sphi 0, %s18
    %s21 = sphi 0, %s19
    %s22 = sphi 0, %s20
    %s23 = sphi 0, %s21
    %s31 = sphi 0, %s31
    %s33 = sphi 0, %s31
    %s34 = sphi 0, %s33
    %s48 = sphi 0, %s34
    %s54 = sphi 0, %s56
    %s57 = sphi 0, %s54
    %s58 = sphi 0, %s57
    %s74 = sphi 0, %s58
    %s80 = sphi 0, %s82
    %s83 = sphi 0, %s80
    %s84 = sphi 0, %s83
    %s100 = sphi 0, %s84
    %s106 = sphi 0, %s108
    %s109 = sphi 0, %s106
    %s110 = sphi 0, %s109
    %s126 = sphi 0, %s110
    %s132 = sphi 0, %s134
    %s135 = sphi 0, %s132
    %s136 = sphi 0, %s135
    %s152 = sphi 0, %s136
    %s158 = sphi 0, %s160
    %s161 = sphi 0, %s158
    %s162 = sphi 0, %s161
    %s178 = sphi 0, %s162
  $region4: #{graphsage_model_forward.1} parent=0 // loop_header_branch
    %14 = sbr.rel (%p12) target = $region8
  $region5: #{graphsage_model_forward.1} parent=0 // loop_body
    %s16 = ssub.s32 %s11, 1
    %s17 = ssub.s32 %s11, 2
    %s24 = sadd.s32 1, %s19
    %p25 = scmp.ge.s32.totalorder %s24, 1
    %s26 = scalar_select %p25, 0, %s24
    %s27 = sadd.s32 1, %s18
    %s28 = scalar_select %p25, %s27, %s18
    %p29 = scmp.ge.s32.totalorder %s28, 5
    %s30 = scalar_select %p29, 0, %s28
    %s32 = sadd.s32 %s31, 1
    %p35 = scmp.eq.s32.totalorder %s11, 4
    %p36 = scmp.ne.s32.totalorder %s31, %s33
    %p37 = scmp.eq.s32.totalorder %s11, 0
    %p38 = por %p36, %p37
    %p39 = scmp.ne.s32.totalorder %s31, %s33
    %p40 = scmp.eq.s32.totalorder %s16, 4
    %p41 = por %p39, %p40
    %p42 = scmp.ne.s32.totalorder %s33, %s34
    %p43 = scmp.eq.s32.totalorder %s16, 0
    %p44 = por %p42, %p43
    %p45 = scmp.ne.s32.totalorder %s33, %s34
    %p46 = scmp.eq.s32.totalorder %s17, 4
    %p47 = por %p45, %p46
    %p49 = scmp.ne.s32.totalorder %s34, %s48
    %p50 = scmp.eq.s32.totalorder %s17, 0
    %p51 = por %p49, %p50
    %s52 = ssub.s32 %s19, %s26
    %p53 = scmp.eq.s32.totalorder %s52, 0
    %s55 = sadd.s32 %s54, 1
    %s56 = scalar_select %p53, %s54, %s55
    %p59 = pneg %p53
    %p60 = scmp.eq.s32.totalorder %s11, 4
    %p61 = por %p59, %p60
    %p62 = scmp.ne.s32.totalorder %s54, %s57
    %p63 = scmp.eq.s32.totalorder %s11, 0
    %p64 = por %p62, %p63
    %p65 = scmp.ne.s32.totalorder %s54, %s57
    %p66 = scmp.eq.s32.totalorder %s16, 4
    %p67 = por %p65, %p66
    %p68 = scmp.ne.s32.totalorder %s57, %s58
    %p69 = scmp.eq.s32.totalorder %s16, 0
    %p70 = por %p68, %p69
    %p71 = scmp.ne.s32.totalorder %s57, %s58
    %p72 = scmp.eq.s32.totalorder %s17, 4
    %p73 = por %p71, %p72
    %p75 = scmp.ne.s32.totalorder %s58, %s74
    %p76 = scmp.eq.s32.totalorder %s17, 0
    %p77 = por %p75, %p76
    %s78 = ssub.s32 %s18, %s30
    %p79 = scmp.eq.s32.totalorder %s78, 0
    %s81 = sadd.s32 %s80, 1
    %s82 = scalar_select %p79, %s80, %s81
    %p85 = pneg %p79
    %p86 = scmp.eq.s32.totalorder %s11, 4
    %p87 = por %p85, %p86
    %p88 = scmp.ne.s32.totalorder %s80, %s83
    %p89 = scmp.eq.s32.totalorder %s11, 0
    %p90 = por %p88, %p89
    %p91 = scmp.ne.s32.totalorder %s80, %s83
    %p92 = scmp.eq.s32.totalorder %s16, 4
    %p93 = por %p91, %p92
    %p94 = scmp.ne.s32.totalorder %s83, %s84
    %p95 = scmp.eq.s32.totalorder %s16, 0
    %p96 = por %p94, %p95
    %p97 = scmp.ne.s32.totalorder %s83, %s84
    %p98 = scmp.eq.s32.totalorder %s17, 4
    %p99 = por %p97, %p98
    %p101 = scmp.ne.s32.totalorder %s84, %s100
    %p102 = scmp.eq.s32.totalorder %s17, 0
    %p103 = por %p101, %p102
    %s104 = ssub.s32 %s18, %s30
    %p105 = scmp.eq.s32.totalorder %s104, 0
    %s107 = sadd.s32 %s106, 1
    %s108 = scalar_select %p105, %s106, %s107
    %p111 = pneg %p105
    %p112 = scmp.eq.s32.totalorder %s11, 4
    %p113 = por %p111, %p112
    %p114 = scmp.ne.s32.totalorder %s106, %s109
    %p115 = scmp.eq.s32.totalorder %s11, 0
    %p116 = por %p114, %p115
    %p117 = scmp.ne.s32.totalorder %s106, %s109
    %p118 = scmp.eq.s32.totalorder %s16, 4
    %p119 = por %p117, %p118
    %p120 = scmp.ne.s32.totalorder %s109, %s110
    %p121 = scmp.eq.s32.totalorder %s16, 0
    %p122 = por %p120, %p121
    %p123 = scmp.ne.s32.totalorder %s109, %s110
    %p124 = scmp.eq.s32.totalorder %s17, 4
    %p125 = por %p123, %p124
    %p127 = scmp.ne.s32.totalorder %s110, %s126
    %p128 = scmp.eq.s32.totalorder %s17, 0
    %p129 = por %p127, %p128
    %s130 = ssub.s32 %s18, %s30
    %p131 = scmp.eq.s32.totalorder %s130, 0
    %s133 = sadd.s32 %s132, 1
    %s134 = scalar_select %p131, %s132, %s133
    %p137 = pneg %p131
    %p138 = scmp.eq.s32.totalorder %s11, 4
    %p139 = por %p137, %p138
    %p140 = scmp.ne.s32.totalorder %s132, %s135
    %p141 = scmp.eq.s32.totalorder %s11, 0
    %p142 = por %p140, %p141
    %p143 = scmp.ne.s32.totalorder %s132, %s135
    %p144 = scmp.eq.s32.totalorder %s16, 4
    %p145 = por %p143, %p144
    %p146 = scmp.ne.s32.totalorder %s135, %s136
    %p147 = scmp.eq.s32.totalorder %s16, 0
    %p148 = por %p146, %p147
    %p149 = scmp.ne.s32.totalorder %s135, %s136
    %p150 = scmp.eq.s32.totalorder %s17, 4
    %p151 = por %p149, %p150
    %p153 = scmp.ne.s32.totalorder %s136, %s152
    %p154 = scmp.eq.s32.totalorder %s17, 0
    %p155 = por %p153, %p154
    %s156 = ssub.s32 %s19, %s26
    %p157 = scmp.eq.s32.totalorder %s156, 0
    %s159 = sadd.s32 %s158, 1
    %s160 = scalar_select %p157, %s158, %s159
    %p163 = pneg %p157
    %p164 = scmp.eq.s32.totalorder %s11, 4
    %p165 = por %p163, %p164
    %p166 = scmp.ne.s32.totalorder %s158, %s161
    %p167 = scmp.eq.s32.totalorder %s11, 0
    %p168 = por %p166, %p167
    %p169 = scmp.ne.s32.totalorder %s158, %s161
    %p170 = scmp.eq.s32.totalorder %s16, 4
    %p171 = por %p169, %p170
    %p172 = scmp.ne.s32.totalorder %s161, %s162
    %p173 = scmp.eq.s32.totalorder %s16, 0
    %p174 = por %p172, %p173
    %p175 = scmp.ne.s32.totalorder %s161, %s162
    %p176 = scmp.eq.s32.totalorder %s17, 4
    %p177 = por %p175, %p176
    %p179 = scmp.ne.s32.totalorder %s162, %s178
    %p180 = scmp.eq.s32.totalorder %s17, 0
    %p181 = por %p179, %p180
    %p182 = scmp.le.s32.totalorder 1, %s11
    %p183 = scmp.lt.s32.totalorder %s11, 6
    %p184 = pnand %p182, %p183
    %p185 = pneg %p184
    // Predicated region
    $region9: #{graphsage_model_forward.1} parent=5 // pred_check
      _
    $region10: #{graphsage_model_forward.1} parent=5 // pred_check_branch
      %187 = sbr.rel (%p184) target = $region12
    $region11: #{graphsage_model_forward.1} parent=5 // pred_region
      %s188 = ssub.s32 %s11, 1
      // Predicated region
      $region13: #{graphsage_model_forward.1} parent=11 // pred_check
        %p189 = pneg %p44
      $region14: #{graphsage_model_forward.1} parent=11 // pred_check_branch
        %191 = sbr.rel (%p189) target = $region16
      $region15: #{graphsage_model_forward.1} parent=11 // pred_region
        _
      $region16: #{graphsage_model_forward.1} parent=11 // pred_fallthru
        _
      // Predicated region
      $region17: #{graphsage_model_forward.1} parent=11 // pred_check
        %p192 = pneg %p70
      $region18: #{graphsage_model_forward.1} parent=11 // pred_check_branch
        %194 = sbr.rel (%p192) target = $region20
      $region19: #{graphsage_model_forward.1} parent=11 // pred_region
        %s195 = smul.u32 16, %s21
        %p196 = scmp.lt.s32.totalorder %s195, 15
        %s197 = scalar_select %p196, %s195, 15
        %s198 = smul.addr %s197, 4
        %s199 = scalar_lea.vmem %s1, %s198
        %s200 = smul.u32 16, %s21
      $region20: #{graphsage_model_forward.1} parent=11 // pred_fallthru
        _
    $region12: #{graphsage_model_forward.1} parent=5 // pred_fallthru
      _
    %p201 = scmp.lt.s32.totalorder %s11, 5
    // Predicated region
    $region21: #{graphsage_model_forward.1} parent=5 // pred_check
      %p202 = pneg %p201
    $region22: #{graphsage_model_forward.1} parent=5 // pred_check_branch
      %204 = sbr.rel (%p202) target = $region24
    $region23: #{graphsage_model_forward.1} parent=5 // pred_region
      // Predicated region
      $region25: #{graphsage_model_forward.1} parent=23 // pred_check
        %p205 = pneg %p90
      $region26: #{graphsage_model_forward.1} parent=23 // pred_check_branch
        %207 = sbr.rel (%p205) target = $region28
      $region27: #{graphsage_model_forward.1} parent=23 // pred_region
        %p208 = scmp.lt.s32.totalorder %s18, 4
        %s209 = scalar_select %p208, %s18, 4
        %s210 = smul.addr %s209, 16
        %s211 = smul.addr %s210, 4
        %s212 = scalar_lea.vmem %s2, %s211
      $region28: #{graphsage_model_forward.1} parent=23 // pred_fallthru
        _
      // Predicated region
      $region29: #{graphsage_model_forward.1} parent=23 // pred_check
        %p213 = pneg %p116
      $region30: #{graphsage_model_forward.1} parent=23 // pred_check_branch
        %215 = sbr.rel (%p213) target = $region32
      $region31: #{graphsage_model_forward.1} parent=23 // pred_region
        %p216 = scmp.lt.s32.totalorder %s18, 4
        %s217 = scalar_select %p216, %s18, 4
        %s218 = smul.addr %s217, 16
        %s219 = smul.addr %s218, 4
        %s220 = scalar_lea.vmem %s3, %s219
      $region32: #{graphsage_model_forward.1} parent=23 // pred_fallthru
        _
      // Predicated region
      $region33: #{graphsage_model_forward.1} parent=23 // pred_check
        %p221 = pneg %p142
      $region34: #{graphsage_model_forward.1} parent=23 // pred_check_branch
        %223 = sbr.rel (%p221) target = $region36
      $region35: #{graphsage_model_forward.1} parent=23 // pred_region
        %p224 = scmp.lt.s32.totalorder %s18, 4
        %s225 = scalar_select %p224, %s18, 4
        %s226 = scalar_lea.vmem %s4, %s225
      $region36: #{graphsage_model_forward.1} parent=23 // pred_fallthru
        _
    $region24: #{graphsage_model_forward.1} parent=5 // pred_fallthru
      _
    %p227 = scmp.le.s32.totalorder 1, %s11
    %p228 = scmp.lt.s32.totalorder %s11, 6
    %p229 = pnand %p227, %p228
    %p230 = pneg %p229
    // Predicated region
    $region37: #{graphsage_model_forward.1} parent=5 // pred_check
      _
    $region38: #{graphsage_model_forward.1} parent=5 // pred_check_branch
      %232 = sbr.rel (%p229) target = $region40
    $region39: #{graphsage_model_forward.1} parent=5 // pred_region
      %s233 = ssub.s32 %s11, 1
      %p234 = pneg %p44
      %p235 = pneg %p41
      %s236 = smul.u32 16, %s21
      %p237 = scmp.lt.s32.totalorder %s236, 15
      %s238 = scalar_select %p237, %s236, 15
      %s239 = smul.addr %s238, 4
      %s240 = scalar_lea.vmem %s1, %s239
      %p241 = pneg %p70
      %p242 = pneg %p67
      %p243 = scmp.lt.s32.totalorder %s20, 4
      %s244 = scalar_select %p243, %s20, 4
      %s245 = smul.addr %s244, 16
      %s246 = smul.addr %s245, 4
      %s247 = scalar_lea.vmem %s2, %s246
      %p248 = pneg %p96
      %p249 = pneg %p93
      %p250 = scmp.lt.s32.totalorder %s20, 4
      %s251 = scalar_select %p250, %s20, 4
      %s252 = smul.addr %s251, 16
      %s253 = smul.addr %s252, 4
      %s254 = scalar_lea.vmem %s3, %s253
      %p255 = pneg %p122
      %p256 = pneg %p119
      %p257 = scmp.lt.s32.totalorder %s20, 4
      %s258 = scalar_select %p257, %s20, 4
      %s259 = scalar_lea.vmem %s4, %s258
      %p260 = pneg %p148
      %p261 = pneg %p145
      %p262 = pneg %p174
      %p263 = pneg %p171
      %s264 = smul.u32 16, %s21
      %p265 = scmp.lt.s32.totalorder %s264, 15
      %s266 = scalar_select %p265, %s264, 15
      %s267 = smul.addr %s266, 8
      %s268 = scalar_lea.vmem %s5, %s267
      %s269 = smul.u32 16, %s21
      %p270 = scmp.lt.s32.totalorder %s269, 15
      %s271 = scalar_select %p270, %s269, 15
      %s272 = smul.addr %s271, 4
      %s273 = scalar_lea.vmem %s1, %s272
      %s274 = smul.u32 16, %s21
      %p275 = scmp.lt.s32.totalorder %s20, 4
      %s276 = scalar_select %p275, %s20, 4
      %s277 = smul.addr %s276, 16
      %s278 = smul.addr %s277, 4
      %s279 = scalar_lea.vmem %s2, %s278
      %p280 = scmp.lt.s32.totalorder %s20, 4
      %s281 = scalar_select %p280, %s20, 4
      %s282 = smul.addr %s281, 16
      %s283 = smul.addr %s282, 4
      %s284 = scalar_lea.vmem %s3, %s283
      %p285 = scmp.lt.s32.totalorder %s20, 4
      %s286 = scalar_select %p285, %s20, 4
      %s287 = scalar_lea.vmem %s4, %s286
      %s288 = smul.u32 16, %s21
      %p289 = scmp.lt.s32.totalorder %s288, 15
      %s290 = scalar_select %p289, %s288, 15
      %s291 = smul.addr %s290, 8
      %s292 = scalar_lea.vmem %s5, %s291
      %s293 = smul.u32 16, %s21
      %p295 = scmp.eq.s32.totalorder %s20, 0
      %p296 = scmp.eq.s32.totalorder %s21, 0
      %p297 = pnand %p295, %p296
      %p298 = pneg %p297
      // Predicated region
      $region41: #{graphsage_model_forward.1} parent=39 // pred_check
        _
      $region42: #{graphsage_model_forward.1} parent=39 // pred_check_branch
        %300 = sbr.rel (%p297) target = $region44
      $region43: #{graphsage_model_forward.1} parent=39 // pred_region
        %v301 = vld [vmem:[%s0] sm:$0xf]
        %v302 = vld [vmem:[%s0 + $0x4] sm:$0xf]
        %v303 = vld [vmem:[%s0 + $0x8] sm:$0xf]
        %v304 = vld [vmem:[%s0 + $0xc] sm:$0xf]
        %v305 = vld [vmem:[%s0 + $0x10] sm:$0xf]
        %v306 = vld [vmem:[%s0 + $0x14] sm:$0xf]
        %v307 = vld [vmem:[%s0 + $0x18] sm:$0xf]
        %v308 = vld [vmem:[%s0 + $0x1c] sm:$0xf]
        %v309 = vld [vmem:[%s0 + $0x20] sm:$0xf]
        %v310 = vld [vmem:[%s0 + $0x24] sm:$0xf]
        %v311 = vld [vmem:[%s0 + $0x28] sm:$0xf]
        %v312 = vld [vmem:[%s0 + $0x2c] sm:$0xf]
        %v313 = vld [vmem:[%s0 + $0x30] sm:$0xf]
        %v314 = vld [vmem:[%s0 + $0x34] sm:$0xf]
        %v315 = vld [vmem:[%s0 + $0x38] sm:$0xf]
        %v316 = vld [vmem:[%s0 + $0x3c] sm:$0xf]
        %v333 = vunpack.c.l.b16 %v301
        %v334 = vunpack.c.l.b16 %v302
        %v335 = vunpack.c.l.b16 %v303
        %v336 = vunpack.c.l.b16 %v304
        %v337 = vunpack.c.l.b16 %v305
        %v338 = vunpack.c.l.b16 %v306
        %v339 = vunpack.c.l.b16 %v307
        %v340 = vunpack.c.l.b16 %v308
        %v341 = vunpack.c.l.b16 %v309
        %v342 = vunpack.c.l.b16 %v310
        %v343 = vunpack.c.l.b16 %v311
        %v344 = vunpack.c.l.b16 %v312
        %v345 = vunpack.c.l.b16 %v313
        %v346 = vunpack.c.l.b16 %v314
        %v347 = vunpack.c.l.b16 %v315
        %v348 = vunpack.c.l.b16 %v316
        %v349 = vpack.c.b16 %v334, %v333
        %v350 = vpack.c.b16 %v336, %v335
        %v351 = vpack.c.b16 %v338, %v337
        %v352 = vpack.c.b16 %v340, %v339
        %v353 = vpack.c.b16 %v342, %v341
        %v354 = vpack.c.b16 %v344, %v343
        %v355 = vpack.c.b16 %v346, %v345
        %v356 = vpack.c.b16 %v348, %v347
        %365 = vst [vmem:[#allocation2] sm:$0xff] %v349
        %366 = vst [vmem:[#allocation2 + $0x8] sm:$0xff] %v350
        %367 = vst [vmem:[#allocation2 + $0x10] sm:$0xff] %v351
        %368 = vst [vmem:[#allocation2 + $0x18] sm:$0xff] %v352
        %369 = vst [vmem:[#allocation2 + $0x20] sm:$0xff] %v353
        %370 = vst [vmem:[#allocation2 + $0x28] sm:$0xff] %v354
        %371 = vst [vmem:[#allocation2 + $0x30] sm:$0xff] %v355
        %372 = vst [vmem:[#allocation2 + $0x38] sm:$0xff] %v356
      $region44: #{graphsage_model_forward.1} parent=39 // pred_fallthru
        _
      %p373 = scmp.lt.s32.totalorder %s20, 0
      %s374 = ssub.s32 0, %s20
      %s375 = scalar_select %p373, %s374, %s20
      %s376 = sand.u32 %s375, 1
      %s377 = ssub.s32 0, %s376
      %s378 = scalar_select %p373, %s377, %s376
      %p379 = scmp.ne.s32.totalorder %s378, 0
      %p380 = scmp.lt.s32.totalorder %s378, 0
      %p381 = pnand %p380, %p379
      %p382 = pneg %p381
      %s383 = sadd.s32 %s378, 2
      %s384 = scalar_select %p382, %s383, %s378
      %p385 = scmp.eq.s32.totalorder %s384, 0
      // Predicated region
      $region45: #{graphsage_model_forward.1} parent=39 // pred_check
        %p386 = pneg %p385
      $region46: #{graphsage_model_forward.1} parent=39 // pred_check_branch
        %388 = sbr.rel (%p386) target = $region48
      $region47: #{graphsage_model_forward.1} parent=39 // pred_region
        %s389 = smul.u32 %s21, 128
        %v390 = vld [vmem:[#allocation2] sm:$0xff]
        %v391 = vld [vmem:[#allocation2 + $0x8] sm:$0xff]
        %v392 = vld [vmem:[#allocation2 + $0x10] sm:$0xff]
        %v393 = vld [vmem:[#allocation2 + $0x18] sm:$0xff]
        %v394 = vld [vmem:[#allocation2 + $0x20] sm:$0xff]
        %v395 = vld [vmem:[#allocation2 + $0x28] sm:$0xff]
        %v396 = vld [vmem:[#allocation2 + $0x30] sm:$0xff]
        %v397 = vld [vmem:[#allocation2 + $0x38] sm:$0xff]
        %s398 = sshra.s32 %s389, 4
        %s399 = sand.u32 %s389, 15
        %s400 = smul.addr %s398, 8
        %s401 = scalar_lea.vmem [#allocation2], %s400
        %v402 = vld [vmem:[%s401] sm:$0xff]
        %v403 = vld [vmem:[%s401 + $0x8] sm:$0xff]
        %v404 = vld [vmem:[%s401 + $0x10] sm:$0xff]
        %v405 = vld [vmem:[%s401 + $0x18] sm:$0xff]
        %v406 = vld [vmem:[%s401 + $0x20] sm:$0xff]
        %v407 = vld [vmem:[%s401 + $0x28] sm:$0xff]
        %v408 = vld [vmem:[%s401 + $0x30] sm:$0xff]
        %v409 = vld [vmem:[%s401 + $0x38] sm:$0xff]
        %v410 = vld [vmem:[%s273] sm:$0xf]
        %v411 = vld [vmem:[%s273 + $0x4] sm:$0xf]
        %v412 = vld [vmem:[%s273 + $0x8] sm:$0xf]
        %v413 = vld [vmem:[%s273 + $0xc] sm:$0xf]
        %v414 = vld [vmem:[%s273 + $0x10] sm:$0xf]
        %v415 = vld [vmem:[%s273 + $0x14] sm:$0xf]
        %v416 = vld [vmem:[%s273 + $0x18] sm:$0xf]
        %v417 = vld [vmem:[%s273 + $0x1c] sm:$0xf]
        %v418 = vld [vmem:[%s273 + $0x20] sm:$0xf]
        %v419 = vld [vmem:[%s273 + $0x24] sm:$0xf]
        %v420 = vld [vmem:[%s273 + $0x28] sm:$0xf]
        %v421 = vld [vmem:[%s273 + $0x2c] sm:$0xf]
        %v422 = vld [vmem:[%s273 + $0x30] sm:$0xf]
        %v423 = vld [vmem:[%s273 + $0x34] sm:$0xf]
        %v424 = vld [vmem:[%s273 + $0x38] sm:$0xf]
        %v425 = vld [vmem:[%s273 + $0x3c] sm:$0xf]
        %v442 = vunpack.c.l.b16 %v410
        %v443 = vunpack.c.l.b16 %v411
        %v444 = vunpack.c.l.b16 %v412
        %v445 = vunpack.c.l.b16 %v413
        %v446 = vunpack.c.l.b16 %v414
        %v447 = vunpack.c.l.b16 %v415
        %v448 = vunpack.c.l.b16 %v416
        %v449 = vunpack.c.l.b16 %v417
        %v450 = vunpack.c.l.b16 %v418
        %v451 = vunpack.c.l.b16 %v419
        %v452 = vunpack.c.l.b16 %v420
        %v453 = vunpack.c.l.b16 %v421
        %v454 = vunpack.c.l.b16 %v422
        %v455 = vunpack.c.l.b16 %v423
        %v456 = vunpack.c.l.b16 %v424
        %v457 = vunpack.c.l.b16 %v425
        %v458 = vpack.c.b16 %v443, %v442
        %v459 = vpack.c.b16 %v445, %v444
        %v460 = vpack.c.b16 %v447, %v446
        %v461 = vpack.c.b16 %v449, %v448
        %v462 = vpack.c.b16 %v451, %v450
        %v463 = vpack.c.b16 %v453, %v452
        %v464 = vpack.c.b16 %v455, %v454
        %v465 = vpack.c.b16 %v457, %v456
        %474 = vmatprep.subr.bf16.mxu0 0
        %475 = vmatpush1.bf16.msra.mxu0 %v390
        %476 = vmatprep.subr.bf16.mxu0 0
        %477 = vmatpush1.bf16.msra.mxu0 %v391
        %478 = vmatprep.subr.bf16.mxu0 0
        %479 = vmatpush1.bf16.msra.mxu0 %v392
        %480 = vmatprep.subr.bf16.mxu0 0
        %481 = vmatpush1.bf16.msra.mxu0 %v393
        %482 = vmatprep.subr.bf16.mxu0 0
        %483 = vmatpush1.bf16.msra.mxu0 %v394
        %484 = vmatprep.subr.bf16.mxu0 0
        %485 = vmatpush1.bf16.msra.mxu0 %v395
        %486 = vmatprep.subr.bf16.mxu0 0
        %487 = vmatpush1.bf16.msra.mxu0 %v396
        %488 = vmatprep.subr.bf16.mxu0 0
        %489 = vmatpush1.bf16.msra.mxu0 %v397
        %490 = vmatprep.subr.bf16.mxu0 0
        %491 = vmatpush1.bf16.msra.mxu0 0
        %492 = vmatprep.subr.bf16.mxu0 0
        %493 = vmatpush1.bf16.msra.mxu0 0
        %494 = vmatprep.subr.bf16.mxu0 0
        %495 = vmatpush1.bf16.msra.mxu0 0
        %496 = vmatprep.subr.bf16.mxu0 0
        %497 = vmatpush1.bf16.msra.mxu0 0
        %498 = vmatprep.subr.bf16.mxu0 0
        %499 = vmatpush1.bf16.msra.mxu0 0
        %500 = vmatprep.subr.bf16.mxu0 0
        %501 = vmatpush1.bf16.msra.mxu0 0
        %502 = vmatprep.subr.bf16.mxu0 0
        %503 = vmatpush1.bf16.msra.mxu0 0
        %504 = vmatprep.subr.bf16.mxu0 0
        %505 = vmatpush1.bf16.msra.mxu0 0
        %506 = vmatprep.mubr.bf16.mxu0 0
        %507 = vmatmul.mubr.bf16.gmra.mrb[0].mxu0 %v458
        %v508 = vpop.f32.mrb[0].mxu0
        %v509 = vadd.f32 0.0, %v508
        %v510 = vpop.f32.mrb[0].mxu0
        %v511 = vpop.f32.mrb[0].mxu0
        %v512 = vadd.f32 0.0, %v511
        %v513 = vpop.f32.mrb[0].mxu0
        %514 = vmatprep.mubr.bf16.mxu0 0
        %515 = vmatmul.mubr.bf16.gmra.mrb[0].mxu0 %v459
        %v516 = vpop.f32.mrb[0].mxu0
        %v517 = vadd.f32 0.0, %v516
        %v518 = vpop.f32.mrb[0].mxu0
        %v519 = vpop.f32.mrb[0].mxu0
        %v520 = vadd.f32 0.0, %v519
        %v521 = vpop.f32.mrb[0].mxu0
        %522 = vmatprep.mubr.bf16.mxu0 0
        %523 = vmatmul.mubr.bf16.gmra.mrb[0].mxu0 %v460
        %v524 = vpop.f32.mrb[0].mxu0
        %v525 = vadd.f32 0.0, %v524
        %v526 = vpop.f32.mrb[0].mxu0
        %v527 = vpop.f32.mrb[0].mxu0
        %v528 = vadd.f32 0.0, %v527
        %v529 = vpop.f32.mrb[0].mxu0
        %530 = vmatprep.mubr.bf16.mxu0 0
        %531 = vmatmul.mubr.bf16.gmra.mrb[0].mxu0 %v461
        %v532 = vpop.f32.mrb[0].mxu0
        %v533 = vadd.f32 0.0, %v532
        %v534 = vpop.f32.mrb[0].mxu0
        %v535 = vpop.f32.mrb[0].mxu0
        %v536 = vadd.f32 0.0, %v535
        %v537 = vpop.f32.mrb[0].mxu0
        %538 = vmatprep.mubr.bf16.mxu0 0
        %539 = vmatmul.mubr.bf16.gmra.mrb[0].mxu0 %v462
        %v540 = vpop.f32.mrb[0].mxu0
        %v541 = vadd.f32 0.0, %v540
        %v542 = vpop.f32.mrb[0].mxu0
        %v543 = vpop.f32.mrb[0].mxu0
        %v544 = vadd.f32 0.0, %v543
        %v545 = vpop.f32.mrb[0].mxu0
        %546 = vmatprep.mubr.bf16.mxu0 0
        %547 = vmatmul.mubr.bf16.gmra.mrb[0].mxu0 %v463
        %v548 = vpop.f32.mrb[0].mxu0
        %v549 = vadd.f32 0.0, %v548
        %v550 = vpop.f32.mrb[0].mxu0
        %v551 = vpop.f32.mrb[0].mxu0
        %v552 = vadd.f32 0.0, %v551
        %v553 = vpop.f32.mrb[0].mxu0
        %554 = vmatprep.mubr.bf16.mxu0 0
        %555 = vmatmul.mubr.bf16.gmra.mrb[0].mxu0 %v464
        %v556 = vpop.f32.mrb[0].mxu0
        %v557 = vadd.f32 0.0, %v556
        %v558 = vpop.f32.mrb[0].mxu0
        %v559 = vpop.f32.mrb[0].mxu0
        %v560 = vadd.f32 0.0, %v559
        %v561 = vpop.f32.mrb[0].mxu0
        %562 = vmatprep.mubr.bf16.mxu0 0
        %563 = vmatmul.mubr.bf16.gmra.mrb[0].mxu0 %v465
        %v564 = vpop.f32.mrb[0].mxu0
        %v565 = vadd.f32 0.0, %v564
        %v566 = vpop.f32.mrb[0].mxu0
        %v567 = vpop.f32.mrb[0].mxu0
        %v568 = vadd.f32 0.0, %v567
        %v569 = vpop.f32.mrb[0].mxu0
        %570 = vdwg.mxu0
        %v571 = vpack.c.bf16 %v512, %v509
        %v572 = vpack.c.bf16 %v520, %v517
        %v573 = vpack.c.bf16 %v528, %v525
        %v574 = vpack.c.bf16 %v536, %v533
        %v575 = vpack.c.bf16 %v544, %v541
        %v576 = vpack.c.bf16 %v552, %v549
        %v577 = vpack.c.bf16 %v560, %v557
        %v578 = vpack.c.bf16 %v568, %v565
        %v579 = vld [vmem:[%s279] sm:$0xf]
        %v580 = vld [vmem:[%s279 + $0x4] sm:$0xf]
        %v581 = vld [vmem:[%s279 + $0x8] sm:$0xf]
        %v582 = vld [vmem:[%s279 + $0xc] sm:$0xf]
        %v583 = vld [vmem:[%s279 + $0x10] sm:$0xf]
        %v584 = vld [vmem:[%s279 + $0x14] sm:$0xf]
        %v585 = vld [vmem:[%s279 + $0x18] sm:$0xf]
        %v586 = vld [vmem:[%s279 + $0x1c] sm:$0xf]
        %v587 = vld [vmem:[%s279 + $0x20] sm:$0xf]
        %v588 = vld [vmem:[%s279 + $0x24] sm:$0xf]
        %v589 = vld [vmem:[%s279 + $0x28] sm:$0xf]
        %v590 = vld [vmem:[%s279 + $0x2c] sm:$0xf]
        %v591 = vld [vmem:[%s279 + $0x30] sm:$0xf]
        %v592 = vld [vmem:[%s279 + $0x34] sm:$0xf]
        %v593 = vld [vmem:[%s279 + $0x38] sm:$0xf]
        %v594 = vld [vmem:[%s279 + $0x3c] sm:$0xf]
        %v595 = vld [vmem:[%s284] sm:$0xf]
        %v596 = vld [vmem:[%s284 + $0x4] sm:$0xf]
        %v597 = vld [vmem:[%s284 + $0x8] sm:$0xf]
        %v598 = vld [vmem:[%s284 + $0xc] sm:$0xf]
        %v599 = vld [vmem:[%s284 + $0x10] sm:$0xf]
        %v600 = vld [vmem:[%s284 + $0x14] sm:$0xf]
        %v601 = vld [vmem:[%s284 + $0x18] sm:$0xf]
        %v602 = vld [vmem:[%s284 + $0x1c] sm:$0xf]
        %v603 = vld [vmem:[%s284 + $0x20] sm:$0xf]
        %v604 = vld [vmem:[%s284 + $0x24] sm:$0xf]
        %v605 = vld [vmem:[%s284 + $0x28] sm:$0xf]
        %v606 = vld [vmem:[%s284 + $0x2c] sm:$0xf]
        %v607 = vld [vmem:[%s284 + $0x30] sm:$0xf]
        %v608 = vld [vmem:[%s284 + $0x34] sm:$0xf]
        %v609 = vld [vmem:[%s284 + $0x38] sm:$0xf]
        %v610 = vld [vmem:[%s284 + $0x3c] sm:$0xf]
        %v627 = vunpack.c.l.b16 %v595
        %v628 = vunpack.c.l.b16 %v596
        %v629 = vunpack.c.l.b16 %v597
        %v630 = vunpack.c.l.b16 %v598
        %v631 = vunpack.c.l.b16 %v599
        %v632 = vunpack.c.l.b16 %v600
        %v633 = vunpack.c.l.b16 %v601
        %v634 = vunpack.c.l.b16 %v602
        %v635 = vunpack.c.l.b16 %v603
        %v636 = vunpack.c.l.b16 %v604
        %v637 = vunpack.c.l.b16 %v605
        %v638 = vunpack.c.l.b16 %v606
        %v639 = vunpack.c.l.b16 %v607
        %v640 = vunpack.c.l.b16 %v608
        %v641 = vunpack.c.l.b16 %v609
        %v642 = vunpack.c.l.b16 %v610
        %v643 = vpack.c.b16 %v628, %v627
        %v644 = vpack.c.b16 %v630, %v629
        %v645 = vpack.c.b16 %v632, %v631
        %v646 = vpack.c.b16 %v634, %v633
        %v647 = vpack.c.b16 %v636, %v635
        %v648 = vpack.c.b16 %v638, %v637
        %v649 = vpack.c.b16 %v640, %v639
        %v650 = vpack.c.b16 %v642, %v641
        %659 = vmatprep.subr.bf16.mxu0 0
        %660 = vmatpush1.bf16.msra.mxu0 %v643
        %661 = vmatprep.subr.bf16.mxu0 0
        %662 = vmatpush1.bf16.msra.mxu0 %v644
        %663 = vmatprep.subr.bf16.mxu0 0
        %664 = vmatpush1.bf16.msra.mxu0 %v645
        %665 = vmatprep.subr.bf16.mxu0 0
        %666 = vmatpush1.bf16.msra.mxu0 %v646
        %667 = vmatprep.subr.bf16.mxu0 0
        %668 = vmatpush1.bf16.msra.mxu0 %v647
        %669 = vmatprep.subr.bf16.mxu0 0
        %670 = vmatpush1.bf16.msra.mxu0 %v648
        %671 = vmatprep.subr.bf16.mxu0 0
        %672 = vmatpush1.bf16.msra.mxu0 %v649
        %673 = vmatprep.subr.bf16.mxu0 0
        %674 = vmatpush1.bf16.msra.mxu0 %v650
        %675 = vmatprep.subr.bf16.mxu0 0
        %676 = vmatpush1.bf16.msra.mxu0 0
        %677 = vmatprep.subr.bf16.mxu0 0
        %678 = vmatpush1.bf16.msra.mxu0 0
        %679 = vmatprep.subr.bf16.mxu0 0
        %680 = vmatpush1.bf16.msra.mxu0 0
        %681 = vmatprep.subr.bf16.mxu0 0
        %682 = vmatpush1.bf16.msra.mxu0 0
        %683 = vmatprep.subr.bf16.mxu0 0
        %684 = vmatpush1.bf16.msra.mxu0 0
        %685 = vmatprep.subr.bf16.mxu0 0
        %686 = vmatpush1.bf16.msra.mxu0 0
        %687 = vmatprep.subr.bf16.mxu0 0
        %688 = vmatpush1.bf16.msra.mxu0 0
        %689 = vmatprep.subr.bf16.mxu0 0
        %690 = vmatpush1.bf16.msra.mxu0 0
        %691 = vmatprep.mubr.bf16.mxu0 0
        %692 = vmatmul.mubr.bf16.gmra.mrb[0].mxu0 %v402
        %v693 = vpop.f32.mrb[0].mxu0
        %v694 = vadd.f32 0.0, %v693
        %v695 = vpop.f32.mrb[0].mxu0
        %v696 = vpop.f32.mrb[0].mxu0
        %v697 = vadd.f32 0.0, %v696
        %v698 = vpop.f32.mrb[0].mxu0
        %699 = vmatprep.mubr.bf16.mxu0 0
        %700 = vmatmul.mubr.bf16.gmra.mrb[0].mxu0 %v403
        %v701 = vpop.f32.mrb[0].mxu0
        %v702 = vadd.f32 0.0, %v701
        %v703 = vpop.f32.mrb[0].mxu0
        %v704 = vpop.f32.mrb[0].mxu0
        %v705 = vadd.f32 0.0, %v704
        %v706 = vpop.f32.mrb[0].mxu0
        %707 = vmatprep.mubr.bf16.mxu0 0
        %708 = vmatmul.mubr.bf16.gmra.mrb[0].mxu0 %v404
        %v709 = vpop.f32.mrb[0].mxu0
        %v710 = vadd.f32 0.0, %v709
        %v711 = vpop.f32.mrb[0].mxu0
        %v712 = vpop.f32.mrb[0].mxu0
        %v713 = vadd.f32 0.0, %v712
        %v714 = vpop.f32.mrb[0].mxu0
        %715 = vmatprep.mubr.bf16.mxu0 0
        %716 = vmatmul.mubr.bf16.gmra.mrb[0].mxu0 %v405
        %v717 = vpop.f32.mrb[0].mxu0
        %v718 = vadd.f32 0.0, %v717
        %v719 = vpop.f32.mrb[0].mxu0
        %v720 = vpop.f32.mrb[0].mxu0
        %v721 = vadd.f32 0.0, %v720
        %v722 = vpop.f32.mrb[0].mxu0
        %723 = vmatprep.mubr.bf16.mxu0 0
        %724 = vmatmul.mubr.bf16.gmra.mrb[0].mxu0 %v406
        %v725 = vpop.f32.mrb[0].mxu0
        %v726 = vadd.f32 0.0, %v725
        %v727 = vpop.f32.mrb[0].mxu0
        %v728 = vpop.f32.mrb[0].mxu0
        %v729 = vadd.f32 0.0, %v728
        %v730 = vpop.f32.mrb[0].mxu0
        %731 = vmatprep.mubr.bf16.mxu0 0
        %732 = vmatmul.mubr.bf16.gmra.mrb[0].mxu0 %v407
        %v733 = vpop.f32.mrb[0].mxu0
        %v734 = vadd.f32 0.0, %v733
        %v735 = vpop.f32.mrb[0].mxu0
        %v736 = vpop.f32.mrb[0].mxu0
        %v737 = vadd.f32 0.0, %v736
        %v738 = vpop.f32.mrb[0].mxu0
        %739 = vmatprep.mubr.bf16.mxu0 0
        %740 = vmatmul.mubr.bf16.gmra.mrb[0].mxu0 %v408
        %v741 = vpop.f32.mrb[0].mxu0
        %v742 = vadd.f32 0.0, %v741
        %v743 = vpop.f32.mrb[0].mxu0
        %v744 = vpop.f32.mrb[0].mxu0
        %v745 = vadd.f32 0.0, %v744
        %v746 = vpop.f32.mrb[0].mxu0
        %747 = vmatprep.mubr.bf16.mxu0 0
        %748 = vmatmul.mubr.bf16.gmra.mrb[0].mxu0 %v409
        %v749 = vpop.f32.mrb[0].mxu0
        %v750 = vadd.f32 0.0, %v749
        %v751 = vpop.f32.mrb[0].mxu0
        %v752 = vpop.f32.mrb[0].mxu0
        %v753 = vadd.f32 0.0, %v752
        %v754 = vpop.f32.mrb[0].mxu0
        %755 = vdwg.mxu0
        %v772 = vunpack.c.l.b16 %v579
        %v773 = vunpack.c.l.b16 %v580
        %v774 = vunpack.c.l.b16 %v581
        %v775 = vunpack.c.l.b16 %v582
        %v776 = vunpack.c.l.b16 %v583
        %v777 = vunpack.c.l.b16 %v584
        %v778 = vunpack.c.l.b16 %v585
        %v779 = vunpack.c.l.b16 %v586
        %v780 = vunpack.c.l.b16 %v587
        %v781 = vunpack.c.l.b16 %v588
        %v782 = vunpack.c.l.b16 %v589
        %v783 = vunpack.c.l.b16 %v590
        %v784 = vunpack.c.l.b16 %v591
        %v785 = vunpack.c.l.b16 %v592
        %v786 = vunpack.c.l.b16 %v593
        %v787 = vunpack.c.l.b16 %v594
        %v788 = vpack.c.b16 %v773, %v772
        %v789 = vpack.c.b16 %v775, %v774
        %v790 = vpack.c.b16 %v777, %v776
        %v791 = vpack.c.b16 %v779, %v778
        %v792 = vpack.c.b16 %v781, %v780
        %v793 = vpack.c.b16 %v783, %v782
        %v794 = vpack.c.b16 %v785, %v784
        %v795 = vpack.c.b16 %v787, %v786
        %804 = vmatprep.subr.bf16.mxu0 0
        %805 = vmatpush1.bf16.msra.mxu0 %v788
        %806 = vmatprep.subr.bf16.mxu0 0
        %807 = vmatpush1.bf16.msra.mxu0 %v789
        %808 = vmatprep.subr.bf16.mxu0 0
        %809 = vmatpush1.bf16.msra.mxu0 %v790
        %810 = vmatprep.subr.bf16.mxu0 0
        %811 = vmatpush1.bf16.msra.mxu0 %v791
        %812 = vmatprep.subr.bf16.mxu0 0
        %813 = vmatpush1.bf16.msra.mxu0 %v792
        %814 = vmatprep.subr.bf16.mxu0 0
        %815 = vmatpush1.bf16.msra.mxu0 %v793
        %816 = vmatprep.subr.bf16.mxu0 0
        %817 = vmatpush1.bf16.msra.mxu0 %v794
        %818 = vmatprep.subr.bf16.mxu0 0
        %819 = vmatpush1.bf16.msra.mxu0 %v795
        %820 = vmatprep.subr.bf16.mxu0 0
        %821 = vmatpush1.bf16.msra.mxu0 0
        %822 = vmatprep.subr.bf16.mxu0 0
        %823 = vmatpush1.bf16.msra.mxu0 0
        %824 = vmatprep.subr.bf16.mxu0 0
        %825 = vmatpush1.bf16.msra.mxu0 0
        %826 = vmatprep.subr.bf16.mxu0 0
        %827 = vmatpush1.bf16.msra.mxu0 0
        %828 = vmatprep.subr.bf16.mxu0 0
        %829 = vmatpush1.bf16.msra.mxu0 0
        %830 = vmatprep.subr.bf16.mxu0 0
        %831 = vmatpush1.bf16.msra.mxu0 0
        %832 = vmatprep.subr.bf16.mxu0 0
        %833 = vmatpush1.bf16.msra.mxu0 0
        %834 = vmatprep.subr.bf16.mxu0 0
        %835 = vmatpush1.bf16.msra.mxu0 0
        %836 = vmatprep.mubr.bf16.mxu0 0
        %837 = vmatmul.mubr.bf16.gmra.mrb[0].mxu0 %v571
        %v838 = vpop.f32.mrb[0].mxu0
        %v839 = vadd.f32 %v694, %v838
        %v840 = vpop.f32.mrb[0].mxu0
        %v841 = vpop.f32.mrb[0].mxu0
        %v842 = vadd.f32 %v697, %v841
        %v843 = vpop.f32.mrb[0].mxu0
        %844 = vmatprep.mubr.bf16.mxu0 0
        %845 = vmatmul.mubr.bf16.gmra.mrb[0].mxu0 %v572
        %v846 = vpop.f32.mrb[0].mxu0
        %v847 = vadd.f32 %v702, %v846
        %v848 = vpop.f32.mrb[0].mxu0
        %v849 = vpop.f32.mrb[0].mxu0
        %v850 = vadd.f32 %v705, %v849
        %v851 = vpop.f32.mrb[0].mxu0
        %852 = vmatprep.mubr.bf16.mxu0 0
        %853 = vmatmul.mubr.bf16.gmra.mrb[0].mxu0 %v573
        %v854 = vpop.f32.mrb[0].mxu0
        %v855 = vadd.f32 %v710, %v854
        %v856 = vpop.f32.mrb[0].mxu0
        %v857 = vpop.f32.mrb[0].mxu0
        %v858 = vadd.f32 %v713, %v857
        %v859 = vpop.f32.mrb[0].mxu0
        %860 = vmatprep.mubr.bf16.mxu0 0
        %861 = vmatmul.mubr.bf16.gmra.mrb[0].mxu0 %v574
        %v862 = vpop.f32.mrb[0].mxu0
        %v863 = vadd.f32 %v718, %v862
        %v864 = vpop.f32.mrb[0].mxu0
        %v865 = vpop.f32.mrb[0].mxu0
        %v866 = vadd.f32 %v721, %v865
        %v867 = vpop.f32.mrb[0].mxu0
        %868 = vmatprep.mubr.bf16.mxu0 0
        %869 = vmatmul.mubr.bf16.gmra.mrb[0].mxu0 %v575
        %v870 = vpop.f32.mrb[0].mxu0
        %v871 = vadd.f32 %v726, %v870
        %v872 = vpop.f32.mrb[0].mxu0
        %v873 = vpop.f32.mrb[0].mxu0
        %v874 = vadd.f32 %v729, %v873
        %v875 = vpop.f32.mrb[0].mxu0
        %876 = vmatprep.mubr.bf16.mxu0 0
        %877 = vmatmul.mubr.bf16.gmra.mrb[0].mxu0 %v576
        %v878 = vpop.f32.mrb[0].mxu0
        %v879 = vadd.f32 %v734, %v878
        %v880 = vpop.f32.mrb[0].mxu0
        %v881 = vpop.f32.mrb[0].mxu0
        %v882 = vadd.f32 %v737, %v881
        %v883 = vpop.f32.mrb[0].mxu0
        %884 = vmatprep.mubr.bf16.mxu0 0
        %885 = vmatmul.mubr.bf16.gmra.mrb[0].mxu0 %v577
        %v886 = vpop.f32.mrb[0].mxu0
        %v887 = vadd.f32 %v742, %v886
        %v888 = vpop.f32.mrb[0].mxu0
        %v889 = vpop.f32.mrb[0].mxu0
        %v890 = vadd.f32 %v745, %v889
        %v891 = vpop.f32.mrb[0].mxu0
        %892 = vmatprep.mubr.bf16.mxu0 0
        %893 = vmatmul.mubr.bf16.gmra.mrb[0].mxu0 %v578
        %v894 = vpop.f32.mrb[0].mxu0
        %v895 = vadd.f32 %v750, %v894
        %v896 = vpop.f32.mrb[0].mxu0
        %v897 = vpop.f32.mrb[0].mxu0
        %v898 = vadd.f32 %v753, %v897
        %v899 = vpop.f32.mrb[0].mxu0
        %900 = vdwg.mxu0
        %v901 = vld [vmem:[%s287] sm:$0x1]
        %v903 = vlaneseq
        %v904 = vshrl.u32 %v903, 7
        %v905 = vsub.s32 0, %v904
        %v906 = vrot.slane %v901, %v905
        %v908 = vadd.f32 %v839, %v906
        %v909 = vadd.f32 %v842, %v906
        %v910 = vadd.f32 %v847, %v906
        %v911 = vadd.f32 %v850, %v906
        %v912 = vadd.f32 %v855, %v906
        %v913 = vadd.f32 %v858, %v906
        %v914 = vadd.f32 %v863, %v906
        %v915 = vadd.f32 %v866, %v906
        %v916 = vadd.f32 %v871, %v906
        %v917 = vadd.f32 %v874, %v906
        %v918 = vadd.f32 %v879, %v906
        %v919 = vadd.f32 %v882, %v906
        %v920 = vadd.f32 %v887, %v906
        %v921 = vadd.f32 %v890, %v906
        %v922 = vadd.f32 %v895, %v906
        %v923 = vadd.f32 %v898, %v906
        %p924 = scmp.ne.s32.totalorder %s20, 4
        // Predicated region
        $region49: #{graphsage_model_forward.1} parent=47 // pred_check
          %p925 = pneg %p924
        $region50: #{graphsage_model_forward.1} parent=47 // pred_check_branch
          %927 = sbr.rel (%p925) target = $region52
        $region51: #{graphsage_model_forward.1} parent=47 // pred_region
          %v928 = vmax.f32 %v908, 0.0
          %v929 = vmax.f32 %v909, 0.0
          %v930 = vmax.f32 %v910, 0.0
          %v931 = vmax.f32 %v911, 0.0
          %v932 = vmax.f32 %v912, 0.0
          %v933 = vmax.f32 %v913, 0.0
          %v934 = vmax.f32 %v914, 0.0
          %v935 = vmax.f32 %v915, 0.0
          %v936 = vmax.f32 %v916, 0.0
          %v937 = vmax.f32 %v917, 0.0
          %v938 = vmax.f32 %v918, 0.0
          %v939 = vmax.f32 %v919, 0.0
          %v940 = vmax.f32 %v920, 0.0
          %v941 = vmax.f32 %v921, 0.0
          %v942 = vmax.f32 %v922, 0.0
          %v943 = vmax.f32 %v923, 0.0
          %v944 = vpack.c.bf16 %v929, %v928
          %v945 = vpack.c.bf16 %v931, %v930
          %v946 = vpack.c.bf16 %v933, %v932
          %v947 = vpack.c.bf16 %v935, %v934
          %v948 = vpack.c.bf16 %v937, %v936
          %v949 = vpack.c.bf16 %v939, %v938
          %v950 = vpack.c.bf16 %v941, %v940
          %v951 = vpack.c.bf16 %v943, %v942
          %s952 = smul.addr %s398, 8
          %s953 = scalar_lea.vmem [#allocation3], %s952
          %954 = vst [vmem:[%s953] sm:$0xff] %v944
          %955 = vst [vmem:[%s953 + $0x8] sm:$0xff] %v945
          %956 = vst [vmem:[%s953 + $0x10] sm:$0xff] %v946
          %957 = vst [vmem:[%s953 + $0x18] sm:$0xff] %v947
          %958 = vst [vmem:[%s953 + $0x20] sm:$0xff] %v948
          %959 = vst [vmem:[%s953 + $0x28] sm:$0xff] %v949
          %960 = vst [vmem:[%s953 + $0x30] sm:$0xff] %v950
          %961 = vst [vmem:[%s953 + $0x38] sm:$0xff] %v951
        $region52: #{graphsage_model_forward.1} parent=47 // pred_fallthru
          _
        %p962 = scmp.eq.s32.totalorder %s20, 4
        // Predicated region
        $region53: #{graphsage_model_forward.1} parent=47 // pred_check
          %p963 = pneg %p962
        $region54: #{graphsage_model_forward.1} parent=47 // pred_check_branch
          %965 = sbr.rel (%p963) target = $region56
        $region55: #{graphsage_model_forward.1} parent=47 // pred_region
          %966 = vst [vmem:[%s292] sm:$0xff] %v908
          %967 = vst [vmem:[%s292 + $0x8] sm:$0xff] %v909
          %968 = vst [vmem:[%s292 + $0x10] sm:$0xff] %v910
          %969 = vst [vmem:[%s292 + $0x18] sm:$0xff] %v911
          %970 = vst [vmem:[%s292 + $0x20] sm:$0xff] %v912
          %971 = vst [vmem:[%s292 + $0x28] sm:$0xff] %v913
          %972 = vst [vmem:[%s292 + $0x30] sm:$0xff] %v914
          %973 = vst [vmem:[%s292 + $0x38] sm:$0xff] %v915
          %974 = vst [vmem:[%s292 + $0x40] sm:$0xff] %v916
          %975 = vst [vmem:[%s292 + $0x48] sm:$0xff] %v917
          %976 = vst [vmem:[%s292 + $0x50] sm:$0xff] %v918
          %977 = vst [vmem:[%s292 + $0x58] sm:$0xff] %v919
          %978 = vst [vmem:[%s292 + $0x60] sm:$0xff] %v920
          %979 = vst [vmem:[%s292 + $0x68] sm:$0xff] %v921
          %980 = vst [vmem:[%s292 + $0x70] sm:$0xff] %v922
          %981 = vst [vmem:[%s292 + $0x78] sm:$0xff] %v923
        $region56: #{graphsage_model_forward.1} parent=47 // pred_fallthru
          _
      $region48: #{graphsage_model_forward.1} parent=39 // pred_fallthru
        _
      %p982 = scmp.eq.s32.totalorder %s384, 1
      // Predicated region
      $region57: #{graphsage_model_forward.1} parent=39 // pred_check
        %p983 = pneg %p982
      $region58: #{graphsage_model_forward.1} parent=39 // pred_check_branch
        %985 = sbr.rel (%p983) target = $region60
      $region59: #{graphsage_model_forward.1} parent=39 // pred_region
        %s986 = smul.u32 %s21, 128
        %v987 = vld [vmem:[#allocation3] sm:$0xff]
        %v988 = vld [vmem:[#allocation3 + $0x8] sm:$0xff]
        %v989 = vld [vmem:[#allocation3 + $0x10] sm:$0xff]
        %v990 = vld [vmem:[#allocation3 + $0x18] sm:$0xff]
        %v991 = vld [vmem:[#allocation3 + $0x20] sm:$0xff]
        %v992 = vld [vmem:[#allocation3 + $0x28] sm:$0xff]
        %v993 = vld [vmem:[#allocation3 + $0x30] sm:$0xff]
        %v994 = vld [vmem:[#allocation3 + $0x38] sm:$0xff]
        %s995 = sshra.s32 %s986, 4
        %s996 = sand.u32 %s986, 15
        %s997 = smul.addr %s995, 8
        %s998 = scalar_lea.vmem [#allocation3], %s997
        %v999 = vld [vmem:[%s998] sm:$0xff]
        %v1000 = vld [vmem:[%s998 + $0x8] sm:$0xff]
        %v1001 = vld [vmem:[%s998 + $0x10] sm:$0xff]
        %v1002 = vld [vmem:[%s998 + $0x18] sm:$0xff]
        %v1003 = vld [vmem:[%s998 + $0x20] sm:$0xff]
        %v1004 = vld [vmem:[%s998 + $0x28] sm:$0xff]
        %v1005 = vld [vmem:[%s998 + $0x30] sm:$0xff]
        %v1006 = vld [vmem:[%s998 + $0x38] sm:$0xff]
        %v1007 = vld [vmem:[%s273] sm:$0xf]
        %v1008 = vld [vmem:[%s273 + $0x4] sm:$0xf]
        %v1009 = vld [vmem:[%s273 + $0x8] sm:$0xf]
        %v1010 = vld [vmem:[%s273 + $0xc] sm:$0xf]
        %v1011 = vld [vmem:[%s273 + $0x10] sm:$0xf]
        %v1012 = vld [vmem:[%s273 + $0x14] sm:$0xf]
        %v1013 = vld [vmem:[%s273 + $0x18] sm:$0xf]
        %v1014 = vld [vmem:[%s273 + $0x1c] sm:$0xf]
        %v1015 = vld [vmem:[%s273 + $0x20] sm:$0xf]
        %v1016 = vld [vmem:[%s273 + $0x24] sm:$0xf]
        %v1017 = vld [vmem:[%s273 + $0x28] sm:$0xf]
        %v1018 = vld [vmem:[%s273 + $0x2c] sm:$0xf]
        %v1019 = vld [vmem:[%s273 + $0x30] sm:$0xf]
        %v1020 = vld [vmem:[%s273 + $0x34] sm:$0xf]
        %v1021 = vld [vmem:[%s273 + $0x38] sm:$0xf]
        %v1022 = vld [vmem:[%s273 + $0x3c] sm:$0xf]
        %v1039 = vunpack.c.l.b16 %v1007
        %v1040 = vunpack.c.l.b16 %v1008
        %v1041 = vunpack.c.l.b16 %v1009
        %v1042 = vunpack.c.l.b16 %v1010
        %v1043 = vunpack.c.l.b16 %v1011
        %v1044 = vunpack.c.l.b16 %v1012
        %v1045 = vunpack.c.l.b16 %v1013
        %v1046 = vunpack.c.l.b16 %v1014
        %v1047 = vunpack.c.l.b16 %v1015
        %v1048 = vunpack.c.l.b16 %v1016
        %v1049 = vunpack.c.l.b16 %v1017
        %v1050 = vunpack.c.l.b16 %v1018
        %v1051 = vunpack.c.l.b16 %v1019
        %v1052 = vunpack.c.l.b16 %v1020
        %v1053 = vunpack.c.l.b16 %v1021
        %v1054 = vunpack.c.l.b16 %v1022
        %v1055 = vpack.c.b16 %v1040, %v1039
        %v1056 = vpack.c.b16 %v1042, %v1041
        %v1057 = vpack.c.b16 %v1044, %v1043
        %v1058 = vpack.c.b16 %v1046, %v1045
        %v1059 = vpack.c.b16 %v1048, %v1047
        %v1060 = vpack.c.b16 %v1050, %v1049
        %v1061 = vpack.c.b16 %v1052, %v1051
        %v1062 = vpack.c.b16 %v1054, %v1053
        %1071 = vmatprep.subr.bf16.mxu0 0
        %1072 = vmatpush1.bf16.msra.mxu0 %v987
        %1073 = vmatprep.subr.bf16.mxu0 0
        %1074 = vmatpush1.bf16.msra.mxu0 %v988
        %1075 = vmatprep.subr.bf16.mxu0 0
        %1076 = vmatpush1.bf16.msra.mxu0 %v989
        %1077 = vmatprep.subr.bf16.mxu0 0
        %1078 = vmatpush1.bf16.msra.mxu0 %v990
        %1079 = vmatprep.subr.bf16.mxu0 0
        %1080 = vmatpush1.bf16.msra.mxu0 %v991
        %1081 = vmatprep.subr.bf16.mxu0 0
        %1082 = vmatpush1.bf16.msra.mxu0 %v992
        %1083 = vmatprep.subr.bf16.mxu0 0
        %1084 = vmatpush1.bf16.msra.mxu0 %v993
        %1085 = vmatprep.subr.bf16.mxu0 0
        %1086 = vmatpush1.bf16.msra.mxu0 %v994
        %1087 = vmatprep.subr.bf16.mxu0 0
        %1088 = vmatpush1.bf16.msra.mxu0 0
        %1089 = vmatprep.subr.bf16.mxu0 0
        %1090 = vmatpush1.bf16.msra.mxu0 0
        %1091 = vmatprep.subr.bf16.mxu0 0
        %1092 = vmatpush1.bf16.msra.mxu0 0
        %1093 = vmatprep.subr.bf16.mxu0 0
        %1094 = vmatpush1.bf16.msra.mxu0 0
        %1095 = vmatprep.subr.bf16.mxu0 0
        %1096 = vmatpush1.bf16.msra.mxu0 0
        %1097 = vmatprep.subr.bf16.mxu0 0
        %1098 = vmatpush1.bf16.msra.mxu0 0
        %1099 = vmatprep.subr.bf16.mxu0 0
        %1100 = vmatpush1.bf16.msra.mxu0 0
        %1101 = vmatprep.subr.bf16.mxu0 0
        %1102 = vmatpush1.bf16.msra.mxu0 0
        %1103 = vmatprep.mubr.bf16.mxu0 0
        %1104 = vmatmul.mubr.bf16.gmra.mrb[0].mxu0 %v1055
        %v1105 = vpop.f32.mrb[0].mxu0
        %v1106 = vadd.f32 0.0, %v1105
        %v1107 = vpop.f32.mrb[0].mxu0
        %v1108 = vpop.f32.mrb[0].mxu0
        %v1109 = vadd.f32 0.0, %v1108
        %v1110 = vpop.f32.mrb[0].mxu0
        %1111 = vmatprep.mubr.bf16.mxu0 0
        %1112 = vmatmul.mubr.bf16.gmra.mrb[0].mxu0 %v1056
        %v1113 = vpop.f32.mrb[0].mxu0
        %v1114 = vadd.f32 0.0, %v1113
        %v1115 = vpop.f32.mrb[0].mxu0
        %v1116 = vpop.f32.mrb[0].mxu0
        %v1117 = vadd.f32 0.0, %v1116
        %v1118 = vpop.f32.mrb[0].mxu0
        %1119 = vmatprep.mubr.bf16.mxu0 0
        %1120 = vmatmul.mubr.bf16.gmra.mrb[0].mxu0 %v1057
        %v1121 = vpop.f32.mrb[0].mxu0
        %v1122 = vadd.f32 0.0, %v1121
        %v1123 = vpop.f32.mrb[0].mxu0
        %v1124 = vpop.f32.mrb[0].mxu0
        %v1125 = vadd.f32 0.0, %v1124
        %v1126 = vpop.f32.mrb[0].mxu0
        %1127 = vmatprep.mubr.bf16.mxu0 0
        %1128 = vmatmul.mubr.bf16.gmra.mrb[0].mxu0 %v1058
        %v1129 = vpop.f32.mrb[0].mxu0
        %v1130 = vadd.f32 0.0, %v1129
        %v1131 = vpop.f32.mrb[0].mxu0
        %v1132 = vpop.f32.mrb[0].mxu0
        %v1133 = vadd.f32 0.0, %v1132
        %v1134 = vpop.f32.mrb[0].mxu0
        %1135 = vmatprep.mubr.bf16.mxu0 0
        %1136 = vmatmul.mubr.bf16.gmra.mrb[0].mxu0 %v1059
        %v1137 = vpop.f32.mrb[0].mxu0
        %v1138 = vadd.f32 0.0, %v1137
        %v1139 = vpop.f32.mrb[0].mxu0
        %v1140 = vpop.f32.mrb[0].mxu0
        %v1141 = vadd.f32 0.0, %v1140
        %v1142 = vpop.f32.mrb[0].mxu0
        %1143 = vmatprep.mubr.bf16.mxu0 0
        %1144 = vmatmul.mubr.bf16.gmra.mrb[0].mxu0 %v1060
        %v1145 = vpop.f32.mrb[0].mxu0
        %v1146 = vadd.f32 0.0, %v1145
        %v1147 = vpop.f32.mrb[0].mxu0
        %v1148 = vpop.f32.mrb[0].mxu0
        %v1149 = vadd.f32 0.0, %v1148
        %v1150 = vpop.f32.mrb[0].mxu0
        %1151 = vmatprep.mubr.bf16.mxu0 0
        %1152 = vmatmul.mubr.bf16.gmra.mrb[0].mxu0 %v1061
        %v1153 = vpop.f32.mrb[0].mxu0
        %v1154 = vadd.f32 0.0, %v1153
        %v1155 = vpop.f32.mrb[0].mxu0
        %v1156 = vpop.f32.mrb[0].mxu0
        %v1157 = vadd.f32 0.0, %v1156
        %v1158 = vpop.f32.mrb[0].mxu0
        %1159 = vmatprep.mubr.bf16.mxu0 0
        %1160 = vmatmul.mubr.bf16.gmra.mrb[0].mxu0 %v1062
        %v1161 = vpop.f32.mrb[0].mxu0
        %v1162 = vadd.f32 0.0, %v1161
        %v1163 = vpop.f32.mrb[0].mxu0
        %v1164 = vpop.f32.mrb[0].mxu0
        %v1165 = vadd.f32 0.0, %v1164
        %v1166 = vpop.f32.mrb[0].mxu0
        %1167 = vdwg.mxu0
        %v1168 = vpack.c.bf16 %v1109, %v1106
        %v1169 = vpack.c.bf16 %v1117, %v1114
        %v1170 = vpack.c.bf16 %v1125, %v1122
        %v1171 = vpack.c.bf16 %v1133, %v1130
        %v1172 = vpack.c.bf16 %v1141, %v1138
        %v1173 = vpack.c.bf16 %v1149, %v1146
        %v1174 = vpack.c.bf16 %v1157, %v1154
        %v1175 = vpack.c.bf16 %v1165, %v1162
        %v1176 = vld [vmem:[%s279] sm:$0xf]
        %v1177 = vld [vmem:[%s279 + $0x4] sm:$0xf]
        %v1178 = vld [vmem:[%s279 + $0x8] sm:$0xf]
        %v1179 = vld [vmem:[%s279 + $0xc] sm:$0xf]
        %v1180 = vld [vmem:[%s279 + $0x10] sm:$0xf]
        %v1181 = vld [vmem:[%s279 + $0x14] sm:$0xf]
        %v1182 = vld [vmem:[%s279 + $0x18] sm:$0xf]
        %v1183 = vld [vmem:[%s279 + $0x1c] sm:$0xf]
        %v1184 = vld [vmem:[%s279 + $0x20] sm:$0xf]
        %v1185 = vld [vmem:[%s279 + $0x24] sm:$0xf]
        %v1186 = vld [vmem:[%s279 + $0x28] sm:$0xf]
        %v1187 = vld [vmem:[%s279 + $0x2c] sm:$0xf]
        %v1188 = vld [vmem:[%s279 + $0x30] sm:$0xf]
        %v1189 = vld [vmem:[%s279 + $0x34] sm:$0xf]
        %v1190 = vld [vmem:[%s279 + $0x38] sm:$0xf]
        %v1191 = vld [vmem:[%s279 + $0x3c] sm:$0xf]
        %v1192 = vld [vmem:[%s284] sm:$0xf]
        %v1193 = vld [vmem:[%s284 + $0x4] sm:$0xf]
        %v1194 = vld [vmem:[%s284 + $0x8] sm:$0xf]
        %v1195 = vld [vmem:[%s284 + $0xc] sm:$0xf]
        %v1196 = vld [vmem:[%s284 + $0x10] sm:$0xf]
        %v1197 = vld [vmem:[%s284 + $0x14] sm:$0xf]
        %v1198 = vld [vmem:[%s284 + $0x18] sm:$0xf]
        %v1199 = vld [vmem:[%s284 + $0x1c] sm:$0xf]
        %v1200 = vld [vmem:[%s284 + $0x20] sm:$0xf]
        %v1201 = vld [vmem:[%s284 + $0x24] sm:$0xf]
        %v1202 = vld [vmem:[%s284 + $0x28] sm:$0xf]
        %v1203 = vld [vmem:[%s284 + $0x2c] sm:$0xf]
        %v1204 = vld [vmem:[%s284 + $0x30] sm:$0xf]
        %v1205 = vld [vmem:[%s284 + $0x34] sm:$0xf]
        %v1206 = vld [vmem:[%s284 + $0x38] sm:$0xf]
        %v1207 = vld [vmem:[%s284 + $0x3c] sm:$0xf]
        %v1224 = vunpack.c.l.b16 %v1192
        %v1225 = vunpack.c.l.b16 %v1193
        %v1226 = vunpack.c.l.b16 %v1194
        %v1227 = vunpack.c.l.b16 %v1195
        %v1228 = vunpack.c.l.b16 %v1196
        %v1229 = vunpack.c.l.b16 %v1197
        %v1230 = vunpack.c.l.b16 %v1198
        %v1231 = vunpack.c.l.b16 %v1199
        %v1232 = vunpack.c.l.b16 %v1200
        %v1233 = vunpack.c.l.b16 %v1201
        %v1234 = vunpack.c.l.b16 %v1202
        %v1235 = vunpack.c.l.b16 %v1203
        %v1236 = vunpack.c.l.b16 %v1204
        %v1237 = vunpack.c.l.b16 %v1205
        %v1238 = vunpack.c.l.b16 %v1206
        %v1239 = vunpack.c.l.b16 %v1207
        %v1240 = vpack.c.b16 %v1225, %v1224
        %v1241 = vpack.c.b16 %v1227, %v1226
        %v1242 = vpack.c.b16 %v1229, %v1228
        %v1243 = vpack.c.b16 %v1231, %v1230
        %v1244 = vpack.c.b16 %v1233, %v1232
        %v1245 = vpack.c.b16 %v1235, %v1234
        %v1246 = vpack.c.b16 %v1237, %v1236
        %v1247 = vpack.c.b16 %v1239, %v1238
        %1256 = vmatprep.subr.bf16.mxu0 0
        %1257 = vmatpush1.bf16.msra.mxu0 %v1240
        %1258 = vmatprep.subr.bf16.mxu0 0
        %1259 = vmatpush1.bf16.msra.mxu0 %v1241
        %1260 = vmatprep.subr.bf16.mxu0 0
        %1261 = vmatpush1.bf16.msra.mxu0 %v1242
        %1262 = vmatprep.subr.bf16.mxu0 0
        %1263 = vmatpush1.bf16.msra.mxu0 %v1243
        %1264 = vmatprep.subr.bf16.mxu0 0
        %1265 = vmatpush1.bf16.msra.mxu0 %v1244
        %1266 = vmatprep.subr.bf16.mxu0 0
        %1267 = vmatpush1.bf16.msra.mxu0 %v1245
        %1268 = vmatprep.subr.bf16.mxu0 0
        %1269 = vmatpush1.bf16.msra.mxu0 %v1246
        %1270 = vmatprep.subr.bf16.mxu0 0
        %1271 = vmatpush1.bf16.msra.mxu0 %v1247
        %1272 = vmatprep.subr.bf16.mxu0 0
        %1273 = vmatpush1.bf16.msra.mxu0 0
        %1274 = vmatprep.subr.bf16.mxu0 0
        %1275 = vmatpush1.bf16.msra.mxu0 0
        %1276 = vmatprep.subr.bf16.mxu0 0
        %1277 = vmatpush1.bf16.msra.mxu0 0
        %1278 = vmatprep.subr.bf16.mxu0 0
        %1279 = vmatpush1.bf16.msra.mxu0 0
        %1280 = vmatprep.subr.bf16.mxu0 0
        %1281 = vmatpush1.bf16.msra.mxu0 0
        %1282 = vmatprep.subr.bf16.mxu0 0
        %1283 = vmatpush1.bf16.msra.mxu0 0
        %1284 = vmatprep.subr.bf16.mxu0 0
        %1285 = vmatpush1.bf16.msra.mxu0 0
        %1286 = vmatprep.subr.bf16.mxu0 0
        %1287 = vmatpush1.bf16.msra.mxu0 0
        %1288 = vmatprep.mubr.bf16.mxu0 0
        %1289 = vmatmul.mubr.bf16.gmra.mrb[0].mxu0 %v999
        %v1290 = vpop.f32.mrb[0].mxu0
        %v1291 = vadd.f32 0.0, %v1290
        %v1292 = vpop.f32.mrb[0].mxu0
        %v1293 = vpop.f32.mrb[0].mxu0
        %v1294 = vadd.f32 0.0, %v1293
        %v1295 = vpop.f32.mrb[0].mxu0
        %1296 = vmatprep.mubr.bf16.mxu0 0
        %1297 = vmatmul.mubr.bf16.gmra.mrb[0].mxu0 %v1000
        %v1298 = vpop.f32.mrb[0].mxu0
        %v1299 = vadd.f32 0.0, %v1298
        %v1300 = vpop.f32.mrb[0].mxu0
        %v1301 = vpop.f32.mrb[0].mxu0
        %v1302 = vadd.f32 0.0, %v1301
        %v1303 = vpop.f32.mrb[0].mxu0
        %1304 = vmatprep.mubr.bf16.mxu0 0
        %1305 = vmatmul.mubr.bf16.gmra.mrb[0].mxu0 %v1001
        %v1306 = vpop.f32.mrb[0].mxu0
        %v1307 = vadd.f32 0.0, %v1306
        %v1308 = vpop.f32.mrb[0].mxu0
        %v1309 = vpop.f32.mrb[0].mxu0
        %v1310 = vadd.f32 0.0, %v1309
        %v1311 = vpop.f32.mrb[0].mxu0
        %1312 = vmatprep.mubr.bf16.mxu0 0
        %1313 = vmatmul.mubr.bf16.gmra.mrb[0].mxu0 %v1002
        %v1314 = vpop.f32.mrb[0].mxu0
        %v1315 = vadd.f32 0.0, %v1314
        %v1316 = vpop.f32.mrb[0].mxu0
        %v1317 = vpop.f32.mrb[0].mxu0
        %v1318 = vadd.f32 0.0, %v1317
        %v1319 = vpop.f32.mrb[0].mxu0
        %1320 = vmatprep.mubr.bf16.mxu0 0
        %1321 = vmatmul.mubr.bf16.gmra.mrb[0].mxu0 %v1003
        %v1322 = vpop.f32.mrb[0].mxu0
        %v1323 = vadd.f32 0.0, %v1322
        %v1324 = vpop.f32.mrb[0].mxu0
        %v1325 = vpop.f32.mrb[0].mxu0
        %v1326 = vadd.f32 0.0, %v1325
        %v1327 = vpop.f32.mrb[0].mxu0
        %1328 = vmatprep.mubr.bf16.mxu0 0
        %1329 = vmatmul.mubr.bf16.gmra.mrb[0].mxu0 %v1004
        %v1330 = vpop.f32.mrb[0].mxu0
        %v1331 = vadd.f32 0.0, %v1330
        %v1332 = vpop.f32.mrb[0].mxu0
        %v1333 = vpop.f32.mrb[0].mxu0
        %v1334 = vadd.f32 0.0, %v1333
        %v1335 = vpop.f32.mrb[0].mxu0
        %1336 = vmatprep.mubr.bf16.mxu0 0
        %1337 = vmatmul.mubr.bf16.gmra.mrb[0].mxu0 %v1005
        %v1338 = vpop.f32.mrb[0].mxu0
        %v1339 = vadd.f32 0.0, %v1338
        %v1340 = vpop.f32.mrb[0].mxu0
        %v1341 = vpop.f32.mrb[0].mxu0
        %v1342 = vadd.f32 0.0, %v1341
        %v1343 = vpop.f32.mrb[0].mxu0
        %1344 = vmatprep.mubr.bf16.mxu0 0
        %1345 = vmatmul.mubr.bf16.gmra.mrb[0].mxu0 %v1006
        %v1346 = vpop.f32.mrb[0].mxu0
        %v1347 = vadd.f32 0.0, %v1346
        %v1348 = vpop.f32.mrb[0].mxu0
        %v1349 = vpop.f32.mrb[0].mxu0
        %v1350 = vadd.f32 0.0, %v1349
        %v1351 = vpop.f32.mrb[0].mxu0
        %1352 = vdwg.mxu0
        %v1369 = vunpack.c.l.b16 %v1176
        %v1370 = vunpack.c.l.b16 %v1177
        %v1371 = vunpack.c.l.b16 %v1178
        %v1372 = vunpack.c.l.b16 %v1179
        %v1373 = vunpack.c.l.b16 %v1180
        %v1374 = vunpack.c.l.b16 %v1181
        %v1375 = vunpack.c.l.b16 %v1182
        %v1376 = vunpack.c.l.b16 %v1183
        %v1377 = vunpack.c.l.b16 %v1184
        %v1378 = vunpack.c.l.b16 %v1185
        %v1379 = vunpack.c.l.b16 %v1186
        %v1380 = vunpack.c.l.b16 %v1187
        %v1381 = vunpack.c.l.b16 %v1188
        %v1382 = vunpack.c.l.b16 %v1189
        %v1383 = vunpack.c.l.b16 %v1190
        %v1384 = vunpack.c.l.b16 %v1191
        %v1385 = vpack.c.b16 %v1370, %v1369
        %v1386 = vpack.c.b16 %v1372, %v1371
        %v1387 = vpack.c.b16 %v1374, %v1373
        %v1388 = vpack.c.b16 %v1376, %v1375
        %v1389 = vpack.c.b16 %v1378, %v1377
        %v1390 = vpack.c.b16 %v1380, %v1379
        %v1391 = vpack.c.b16 %v1382, %v1381
        %v1392 = vpack.c.b16 %v1384, %v1383
        %1401 = vmatprep.subr.bf16.mxu0 0
        %1402 = vmatpush1.bf16.msra.mxu0 %v1385
        %1403 = vmatprep.subr.bf16.mxu0 0
        %1404 = vmatpush1.bf16.msra.mxu0 %v1386
        %1405 = vmatprep.subr.bf16.mxu0 0
        %1406 = vmatpush1.bf16.msra.mxu0 %v1387
        %1407 = vmatprep.subr.bf16.mxu0 0
        %1408 = vmatpush1.bf16.msra.mxu0 %v1388
        %1409 = vmatprep.subr.bf16.mxu0 0
        %1410 = vmatpush1.bf16.msra.mxu0 %v1389
        %1411 = vmatprep.subr.bf16.mxu0 0
        %1412 = vmatpush1.bf16.msra.mxu0 %v1390
        %1413 = vmatprep.subr.bf16.mxu0 0
        %1414 = vmatpush1.bf16.msra.mxu0 %v1391
        %1415 = vmatprep.subr.bf16.mxu0 0
        %1416 = vmatpush1.bf16.msra.mxu0 %v1392
        %1417 = vmatprep.subr.bf16.mxu0 0
        %1418 = vmatpush1.bf16.msra.mxu0 0
        %1419 = vmatprep.subr.bf16.mxu0 0
        %1420 = vmatpush1.bf16.msra.mxu0 0
        %1421 = vmatprep.subr.bf16.mxu0 0
        %1422 = vmatpush1.bf16.msra.mxu0 0
        %1423 = vmatprep.subr.bf16.mxu0 0
        %1424 = vmatpush1.bf16.msra.mxu0 0
        %1425 = vmatprep.subr.bf16.mxu0 0
        %1426 = vmatpush1.bf16.msra.mxu0 0
        %1427 = vmatprep.subr.bf16.mxu0 0
        %1428 = vmatpush1.bf16.msra.mxu0 0
        %1429 = vmatprep.subr.bf16.mxu0 0
        %1430 = vmatpush1.bf16.msra.mxu0 0
        %1431 = vmatprep.subr.bf16.mxu0 0
        %1432 = vmatpush1.bf16.msra.mxu0 0
        %1433 = vmatprep.mubr.bf16.mxu0 0
        %1434 = vmatmul.mubr.bf16.gmra.mrb[0].mxu0 %v1168
        %v1435 = vpop.f32.mrb[0].mxu0
        %v1436 = vadd.f32 %v1291, %v1435
        %v1437 = vpop.f32.mrb[0].mxu0
        %v1438 = vpop.f32.mrb[0].mxu0
        %v1439 = vadd.f32 %v1294, %v1438
        %v1440 = vpop.f32.mrb[0].mxu0
        %1441 = vmatprep.mubr.bf16.mxu0 0
        %1442 = vmatmul.mubr.bf16.gmra.mrb[0].mxu0 %v1169
        %v1443 = vpop.f32.mrb[0].mxu0
        %v1444 = vadd.f32 %v1299, %v1443
        %v1445 = vpop.f32.mrb[0].mxu0
        %v1446 = vpop.f32.mrb[0].mxu0
        %v1447 = vadd.f32 %v1302, %v1446
        %v1448 = vpop.f32.mrb[0].mxu0
        %1449 = vmatprep.mubr.bf16.mxu0 0
        %1450 = vmatmul.mubr.bf16.gmra.mrb[0].mxu0 %v1170
        %v1451 = vpop.f32.mrb[0].mxu0
        %v1452 = vadd.f32 %v1307, %v1451
        %v1453 = vpop.f32.mrb[0].mxu0
        %v1454 = vpop.f32.mrb[0].mxu0
        %v1455 = vadd.f32 %v1310, %v1454
        %v1456 = vpop.f32.mrb[0].mxu0
        %1457 = vmatprep.mubr.bf16.mxu0 0
        %1458 = vmatmul.mubr.bf16.gmra.mrb[0].mxu0 %v1171
        %v1459 = vpop.f32.mrb[0].mxu0
        %v1460 = vadd.f32 %v1315, %v1459
        %v1461 = vpop.f32.mrb[0].mxu0
        %v1462 = vpop.f32.mrb[0].mxu0
        %v1463 = vadd.f32 %v1318, %v1462
        %v1464 = vpop.f32.mrb[0].mxu0
        %1465 = vmatprep.mubr.bf16.mxu0 0
        %1466 = vmatmul.mubr.bf16.gmra.mrb[0].mxu0 %v1172
        %v1467 = vpop.f32.mrb[0].mxu0
        %v1468 = vadd.f32 %v1323, %v1467
        %v1469 = vpop.f32.mrb[0].mxu0
        %v1470 = vpop.f32.mrb[0].mxu0
        %v1471 = vadd.f32 %v1326, %v1470
        %v1472 = vpop.f32.mrb[0].mxu0
        %1473 = vmatprep.mubr.bf16.mxu0 0
        %1474 = vmatmul.mubr.bf16.gmra.mrb[0].mxu0 %v1173
        %v1475 = vpop.f32.mrb[0].mxu0
        %v1476 = vadd.f32 %v1331, %v1475
        %v1477 = vpop.f32.mrb[0].mxu0
        %v1478 = vpop.f32.mrb[0].mxu0
        %v1479 = vadd.f32 %v1334, %v1478
        %v1480 = vpop.f32.mrb[0].mxu0
        %1481 = vmatprep.mubr.bf16.mxu0 0
        %1482 = vmatmul.mubr.bf16.gmra.mrb[0].mxu0 %v1174
        %v1483 = vpop.f32.mrb[0].mxu0
        %v1484 = vadd.f32 %v1339, %v1483
        %v1485 = vpop.f32.mrb[0].mxu0
        %v1486 = vpop.f32.mrb[0].mxu0
        %v1487 = vadd.f32 %v1342, %v1486
        %v1488 = vpop.f32.mrb[0].mxu0
        %1489 = vmatprep.mubr.bf16.mxu0 0
        %1490 = vmatmul.mubr.bf16.gmra.mrb[0].mxu0 %v1175
        %v1491 = vpop.f32.mrb[0].mxu0
        %v1492 = vadd.f32 %v1347, %v1491
        %v1493 = vpop.f32.mrb[0].mxu0
        %v1494 = vpop.f32.mrb[0].mxu0
        %v1495 = vadd.f32 %v1350, %v1494
        %v1496 = vpop.f32.mrb[0].mxu0
        %1497 = vdwg.mxu0
        %v1498 = vld [vmem:[%s287] sm:$0x1]
        %v1500 = vlaneseq
        %v1501 = vshrl.u32 %v1500, 7
        %v1502 = vsub.s32 0, %v1501
        %v1503 = vrot.slane %v1498, %v1502
        %v1505 = vadd.f32 %v1436, %v1503
        %v1506 = vadd.f32 %v1439, %v1503
        %v1507 = vadd.f32 %v1444, %v1503
        %v1508 = vadd.f32 %v1447, %v1503
        %v1509 = vadd.f32 %v1452, %v1503
        %v1510 = vadd.f32 %v1455, %v1503
        %v1511 = vadd.f32 %v1460, %v1503
        %v1512 = vadd.f32 %v1463, %v1503
        %v1513 = vadd.f32 %v1468, %v1503
        %v1514 = vadd.f32 %v1471, %v1503
        %v1515 = vadd.f32 %v1476, %v1503
        %v1516 = vadd.f32 %v1479, %v1503
        %v1517 = vadd.f32 %v1484, %v1503
        %v1518 = vadd.f32 %v1487, %v1503
        %v1519 = vadd.f32 %v1492, %v1503
        %v1520 = vadd.f32 %v1495, %v1503
        %p1521 = scmp.ne.s32.totalorder %s20, 4
        // Predicated region
        $region61: #{graphsage_model_forward.1} parent=59 // pred_check
          %p1522 = pneg %p1521
        $region62: #{graphsage_model_forward.1} parent=59 // pred_check_branch
          %1524 = sbr.rel (%p1522) target = $region64
        $region63: #{graphsage_model_forward.1} parent=59 // pred_region
          %v1525 = vmax.f32 %v1505, 0.0
          %v1526 = vmax.f32 %v1506, 0.0
          %v1527 = vmax.f32 %v1507, 0.0
          %v1528 = vmax.f32 %v1508, 0.0
          %v1529 = vmax.f32 %v1509, 0.0
          %v1530 = vmax.f32 %v1510, 0.0
          %v1531 = vmax.f32 %v1511, 0.0
          %v1532 = vmax.f32 %v1512, 0.0
          %v1533 = vmax.f32 %v1513, 0.0
          %v1534 = vmax.f32 %v1514, 0.0
          %v1535 = vmax.f32 %v1515, 0.0
          %v1536 = vmax.f32 %v1516, 0.0
          %v1537 = vmax.f32 %v1517, 0.0
          %v1538 = vmax.f32 %v1518, 0.0
          %v1539 = vmax.f32 %v1519, 0.0
          %v1540 = vmax.f32 %v1520, 0.0
          %v1541 = vpack.c.bf16 %v1526, %v1525
          %v1542 = vpack.c.bf16 %v1528, %v1527
          %v1543 = vpack.c.bf16 %v1530, %v1529
          %v1544 = vpack.c.bf16 %v1532, %v1531
          %v1545 = vpack.c.bf16 %v1534, %v1533
          %v1546 = vpack.c.bf16 %v1536, %v1535
          %v1547 = vpack.c.bf16 %v1538, %v1537
          %v1548 = vpack.c.bf16 %v1540, %v1539
          %s1549 = smul.addr %s995, 8
          %s1550 = scalar_lea.vmem [#allocation2], %s1549
          %1551 = vst [vmem:[%s1550] sm:$0xff] %v1541
          %1552 = vst [vmem:[%s1550 + $0x8] sm:$0xff] %v1542
          %1553 = vst [vmem:[%s1550 + $0x10] sm:$0xff] %v1543
          %1554 = vst [vmem:[%s1550 + $0x18] sm:$0xff] %v1544
          %1555 = vst [vmem:[%s1550 + $0x20] sm:$0xff] %v1545
          %1556 = vst [vmem:[%s1550 + $0x28] sm:$0xff] %v1546
          %1557 = vst [vmem:[%s1550 + $0x30] sm:$0xff] %v1547
          %1558 = vst [vmem:[%s1550 + $0x38] sm:$0xff] %v1548
        $region64: #{graphsage_model_forward.1} parent=59 // pred_fallthru
          _
        %p1559 = scmp.eq.s32.totalorder %s20, 4
        // Predicated region
        $region65: #{graphsage_model_forward.1} parent=59 // pred_check
          %p1560 = pneg %p1559
        $region66: #{graphsage_model_forward.1} parent=59 // pred_check_branch
          %1562 = sbr.rel (%p1560) target = $region68
        $region67: #{graphsage_model_forward.1} parent=59 // pred_region
          %1563 = vst [vmem:[%s292] sm:$0xff] %v1505
          %1564 = vst [vmem:[%s292 + $0x8] sm:$0xff] %v1506
          %1565 = vst [vmem:[%s292 + $0x10] sm:$0xff] %v1507
          %1566 = vst [vmem:[%s292 + $0x18] sm:$0xff] %v1508
          %1567 = vst [vmem:[%s292 + $0x20] sm:$0xff] %v1509
          %1568 = vst [vmem:[%s292 + $0x28] sm:$0xff] %v1510
          %1569 = vst [vmem:[%s292 + $0x30] sm:$0xff] %v1511
          %1570 = vst [vmem:[%s292 + $0x38] sm:$0xff] %v1512
          %1571 = vst [vmem:[%s292 + $0x40] sm:$0xff] %v1513
          %1572 = vst [vmem:[%s292 + $0x48] sm:$0xff] %v1514
          %1573 = vst [vmem:[%s292 + $0x50] sm:$0xff] %v1515
          %1574 = vst [vmem:[%s292 + $0x58] sm:$0xff] %v1516
          %1575 = vst [vmem:[%s292 + $0x60] sm:$0xff] %v1517
          %1576 = vst [vmem:[%s292 + $0x68] sm:$0xff] %v1518
          %1577 = vst [vmem:[%s292 + $0x70] sm:$0xff] %v1519
          %1578 = vst [vmem:[%s292 + $0x78] sm:$0xff] %v1520
        $region68: #{graphsage_model_forward.1} parent=59 // pred_fallthru
          _
      $region60: #{graphsage_model_forward.1} parent=39 // pred_fallthru
        _
      %s1579 = smul.u32 16, %s21
      %p1580 = scmp.lt.s32.totalorder %s1579, 15
      %s1581 = scalar_select %p1580, %s1579, 15
      %s1582 = smul.addr %s1581, 8
      %s1583 = scalar_lea.vmem %s5, %s1582
      // Predicated region
      $region69: #{graphsage_model_forward.1} parent=39 // pred_check
        %p1584 = pneg %p171
      $region70: #{graphsage_model_forward.1} parent=39 // pred_check_branch
        %1586 = sbr.rel (%p1584) target = $region72
      $region71: #{graphsage_model_forward.1} parent=39 // pred_region
        %s1587 = smul.u32 16, %s21
      $region72: #{graphsage_model_forward.1} parent=39 // pred_fallthru
        _
      // Predicated region
      $region73: #{graphsage_model_forward.1} parent=39 // pred_check
        %p1588 = pneg %p171
      $region74: #{graphsage_model_forward.1} parent=39 // pred_check_branch
        %1590 = sbr.rel (%p1588) target = $region76
      $region75: #{graphsage_model_forward.1} parent=39 // pred_region
        %s1591 = smul.u32 16, %s21
        %p1592 = scmp.lt.s32.totalorder %s1591, 15
        %s1593 = scalar_select %p1592, %s1591, 15
        %s1594 = smul.addr %s1593, 8
        %s1595 = scalar_lea.vmem %s5, %s1594
      $region76: #{graphsage_model_forward.1} parent=39 // pred_fallthru
        _
    $region40: #{graphsage_model_forward.1} parent=5 // pred_fallthru
      _
    %p1596 = scmp.le.s32.totalorder 2, %s11
    // Predicated region
    $region77: #{graphsage_model_forward.1} parent=5 // pred_check
      %p1597 = pneg %p1596
    $region78: #{graphsage_model_forward.1} parent=5 // pred_check_branch
      %1599 = sbr.rel (%p1597) target = $region80
    $region79: #{graphsage_model_forward.1} parent=5 // pred_region
      %s1600 = ssub.s32 %s11, 2
    $region80: #{graphsage_model_forward.1} parent=5 // pred_fallthru
      _
  $region6: #{graphsage_model_forward.1} parent=0 // loop_footer
    %s15 = sadd.s32 1, %s11
  $region7: #{graphsage_model_forward.1} parent=0 // loop_footer_branch
    %10 = sbr.rel target = $region3
  $region8: #{graphsage_model_forward.1} parent=0 // loop_exit
    _

</llo_original>
